<compile_context>
chip_gen: v5e
topology: v5e:2x2
jax: 0.10.0
libtpu: 0.0.40
codegen_flags: <defaults>
</compile_context>

<pallas_src>
import jax
import jax.numpy as jnp
from jax.experimental import pallas as pl
from jax.experimental.pallas import tpu as pltpu


def _hd_normalize(x):
    # torchhd.MAPTensor.normalize()
    # TODO(synk): exact zeros map to -1 here (torch.sign would give 0); this
    # matches the hard-quantize convention assumed by the reference below.
    return jnp.where(x > 0, 1.0, -1.0).astype(jnp.float32)


# ----------------------------------------------------------------------------
# Pallas kernel: single invocation, everything resident in VMEM.
# ----------------------------------------------------------------------------
def hdprompt_kernel(x_ref, basis_ref, k_ref, w_ref,
                    p_ref, knew_ref, cos_ref, qhd_ref):
    """HDPrompt forward hot path + fused top-1 key update.

    x_ref     : [B, D]   f32   query activations
    basis_ref : [D, H]   f32   HD encoder basis (+-1)
    k_ref     : [P, H]   f32   key pool (+-1)          (aliased with knew_ref)
    w_ref     : [H, L*D] bf16  folded decoder weights  vb[l] * (attn[l] @ gen[l])
    p_ref     : [B, L*D] f32   decoded prompt, lane-dense        (output)
    knew_ref  : [P, H]   f32   updated key pool                  (output, aliased)
    cos_ref   : [B, P]   f32   query/key similarities            (debug output)
    qhd_ref   : [B, H]   f32   normalized HD encoding            (debug output)
    """
    B, P = cos_ref.shape

    # --- HDEncoder: q_hd = normalize(x @ basis) ----------------------- [B, H]
    # Kept f32: the hard sign threshold must match the f32 reference exactly
    # and this matmul is not the bottleneck.
    enc = jnp.dot(x_ref[...], basis_ref[...], preferred_element_type=jnp.float32)
    q_hd = _hd_normalize(enc)
    qhd_ref[...] = q_hd

    q_bf = q_hd.astype(jnp.bfloat16)            # strictly +-1 -> bf16 exact

    # --- cos_sim = q_hd @ K.T  (bf16 +-1 operands, f32 accum -> exact ints)
    k_f32 = k_ref[...]
    k_bf = k_f32.astype(jnp.bfloat16)
    cos = jax.lax.dot_general(q_bf, k_bf,
                              dimension_numbers=(((1,), (1,)), ((), ())),
                              preferred_element_type=jnp.float32)       # [B, P]
    cos_ref[...] = cos

    # --- Decoder (all L slices at once): normalize(q_hd * vb) == q_hd * vb
    # (both strictly +-1), vb already folded into w_ref, so the whole decode is
    # a single lane-dense (B,H) @ (H, L*D) bf16 MXU matmul.
    p_ref[...] = jnp.dot(q_bf, w_ref[...], preferred_element_type=jnp.float32)

    # --- Fused top-1 key update (replaces XLA argmax / gather / scatter) -----
    # torch: k_idx = topk(cos, 1); K[k_idx] = normalize(K[k_idx] + q_hd)
    # Semantics matched: ties -> lowest key index; duplicate selections across
    # the batch -> last batch row wins; all updates read the ORIGINAL pool.
    # Everything is expressed with masks + tiny matmuls (no dynamic indexing).
    lane = jax.lax.broadcasted_iota(jnp.int32, (B, P), 1).astype(jnp.float32)
    row = jax.lax.broadcasted_iota(jnp.int32, (B, P), 0).astype(jnp.float32)

    m = jnp.max(cos, axis=1, keepdims=True)                             # [B,1]
    is_max = cos >= m                                                   # ties kept
    k_idx = jnp.min(jnp.where(is_max, lane, jnp.float32(P)),
                    axis=1, keepdims=True)                              # [B,1] first max
    sel = (lane == k_idx).astype(jnp.float32)                           # [B,P] one-hot

    # Row gather via a tiny MXU matmul: K_sel[b] = K[k_idx[b]]  (exact, +-1)
    K_sel = jnp.dot(sel.astype(jnp.bfloat16), k_bf,
                    preferred_element_type=jnp.float32)                 # [B,H]
    upd = _hd_normalize(K_sel + q_hd)                                   # bundle+normalize

    # Last-writer-wins pick mask: for each key, keep the largest b that chose it.
    wgt = jnp.where(sel > 0.0, row + 1.0, 0.0)                          # [B,P]
    last = jnp.max(wgt, axis=0, keepdims=True)                          # [1,P]
    pick = ((sel > 0.0) & (wgt >= last)).astype(jnp.float32)            # [B,P]

    # Scatter via matmul: K_new = K + pick^T @ (upd - K_sel).
    # delta in {-2, 0, +2} and pick in {0, 1} -> bf16 exact, single-term sums.
    delta = (upd - K_sel).astype(jnp.bfloat16)                          # [B,H]
    scatter = jax.lax.dot_general(pick.astype(jnp.bfloat16), delta,
                                  dimension_numbers=(((0,), (0,)), ((), ())),
                                  preferred_element_type=jnp.float32)   # [P,H]
    knew_ref[...] = k_f32 + scatter


# ----------------------------------------------------------------------------
# One-time precompute of the folded decoder weights (stored in bf16).
# ----------------------------------------------------------------------------
def fold_decoder_weights(value_basis, hd_attns, emb_gen):
    """W_cat[h, l*D + d] = value_basis[l,h] * sum_f hd_attns[l,h,f] * emb_gen[l,f,d].

    Exact only while value_basis (and q_hd) are strictly +-1 (torchhd MAP
    construction; they are buffers, not trained parameters).  Returned in bf16
    to halve the dominant HBM->VMEM DMA; tolerance-equal, not bitwise-equal.
    TODO(synk): if hd_attns / emb_gen are trained, re-fold after every update
    (the cached fold goes stale and gradients do not flow through it).
    """
    hp = jax.lax.Precision.HIGHEST
    w = jnp.einsum('lhf,lfd->lhd', hd_attns, emb_gen, precision=hp)   # [L, H, D]
    w = w * value_basis[:, :, None]                                   # fold vb
    L, H, D = w.shape
    return jnp.transpose(w, (1, 0, 2)).reshape(H, L * D).astype(jnp.bfloat16)


def hdprompt_pallas(x_querry, enc_basis, K, w_cat):
    """Returns (P_flat [B, L*D] f32, K_new [P,H] f32, cos [B,P] f32, q_hd [B,H] f32)."""
    B, _ = x_querry.shape
    H = enc_basis.shape[1]
    P = K.shape[0]
    LD = w_cat.shape[1]

    vmem = pl.BlockSpec(memory_space=pltpu.MemorySpace.VMEM)
    p_flat, k_new, cos_sim, q_hd = pl.pallas_call(
        hdprompt_kernel,
        out_shape=(
            jax.ShapeDtypeStruct((B, LD), jnp.float32),   # decoded prompt (lane-dense)
            jax.ShapeDtypeStruct((P, H), jnp.float32),    # updated key pool
            jax.ShapeDtypeStruct((B, P), jnp.float32),    # cos_sim (debug/validation)
            jax.ShapeDtypeStruct((B, H), jnp.float32),    # q_hd    (debug/validation)
        ),
        in_specs=[vmem, vmem, vmem, vmem],
        out_specs=(vmem, vmem, vmem, vmem),
        input_output_aliases={2: 1},   # K (input 2) aliases K_new (output 1)
    )(x_querry, enc_basis, K, w_cat)
    return p_flat, k_new, cos_sim, q_hd


# ----------------------------------------------------------------------------
# Full HDPrompt.forward semantics (top_k = 1, loss = 0).
# ----------------------------------------------------------------------------
E_LAYERS = (0, 1, 2, 3, 4)


def hdprompt_forward(params, x_querry, l, x_block, train=False, task_id=None):
    if l not in E_LAYERS:
        return None, 0.0, x_block, params

    K = params[f"e_k_{l}"]
    w_cat = params.get("dec_w_cat")
    if w_cat is None:  # fold once; decoder params don't change inside forward()
        w_cat = fold_decoder_weights(params["value_basis"],
                                     params["hd_attns"], params["emb_gen"])

    P_flat, K_new, _cos, _q_hd = hdprompt_pallas(
        x_querry, params["enc_basis"], K, w_cat)

    B, D = x_querry.shape
    L = P_flat.shape[1] // D
    P_dec = P_flat.reshape(B, L, D)      # free row-major reshape

    new_params = dict(params)
    new_params[f"e_k_{l}"] = K_new       # module-state side effect (key bundling)
    new_params["dec_w_cat"] = w_cat

    i = L // 2
    Ek = P_dec[:, :i, :]
    Ev = P_dec[:, i:, :]
    loss = 0.0
    return [Ek, Ev], loss, x_block, new_params


# ----------------------------------------------------------------------------
# Pure-JAX reference (for a sanity check), including the key-pool update with
# the same semantics (first-index ties, last batch row wins, reads original K).
# ----------------------------------------------------------------------------
def hdprompt_reference(params, x_querry, l):
    hp = jax.lax.Precision.HIGHEST
    basis = params["enc_basis"]
    K = params[f"e_k_{l}"]
    vb = params["value_basis"]
    q_hd = _hd_normalize(jnp.einsum("bd,dh->bh", x_querry, basis, precision=hp))
    cos_sim = jnp.einsum("bh,kh->bk", q_hd, K, precision=hp)
    P_ = _hd_normalize(q_hd[:, None, :] * vb[None, :, :])
    P_ = jnp.einsum("blh,lhf->blf", P_, params["hd_attns"], precision=hp)
    P_ = jnp.einsum("blf,lfd->bld", P_, params["emb_gen"], precision=hp)

    k_idx = jnp.argmax(cos_sim, axis=1)                    # first occurrence on ties
    upd = _hd_normalize(K[k_idx] + q_hd)                   # from ORIGINAL K
    K_new = K
    for b in range(q_hd.shape[0]):                         # last writer wins
        K_new = K_new.at[int(k_idx[b])].set(upd[b])
    return cos_sim, P_, q_hd, K_new


if __name__ == "__main__":
    # Small, module-consistent shapes:
    #   emb_d=128, hd_dim=512, e_pool_size=16, e_p_length=8,
    #   dec_N=16 -> features = emb_d // dec_N = 8, batch B=8, layer l=0.
    B, emb_d, hd_dim = 8, 128, 512
    e_pool_size, e_p_length = 16, 8
    dec_N = 16
    features = emb_d // dec_N
    layer = 0

    key = jax.random.PRNGKey(0)
    ks = jax.random.split(key, 8)

    def rand_pm1(k, shape):  # torchhd MAPTensor.random -> +-1 hypervectors
        return jnp.where(jax.random.bernoulli(k, 0.5, shape), 1.0, -1.0).astype(jnp.float32)

    params = {
        "enc_basis":    rand_pm1(ks[0], (emb_d, hd_dim)),
        f"e_k_{layer}": rand_pm1(ks[1], (e_pool_size, hd_dim)),
        "value_basis":  rand_pm1(ks[2], (e_p_length, hd_dim)),
        "hd_attns":     jax.random.normal(ks[3], (e_p_length, hd_dim, features), jnp.float32),
        "emb_gen":      jax.random.normal(ks[4], (e_p_length, features, emb_d), jnp.float32),
    }
    # TODO(synk): e_p_{l} = bind(K, value_basis) is created in __init__ but never
    # used in forward(); it is intentionally not materialized here.

    x_querry = jax.random.normal(ks[5], (B, emb_d), jnp.float32)
    x_block = jax.random.normal(ks[6], (B, 4, emb_d), jnp.float32)  # pass-through

    # --- Reference first (uses the original, non-donated K) ------------------
    cos_ref, P_ref, q_ref, Knew_ref = hdprompt_reference(params, x_querry, layer)
    p_scale = jnp.max(jnp.abs(P_ref))

    # --- Direct kernel check (fresh copy of K: the pool input is donated) ----
    w_cat = fold_decoder_weights(params["value_basis"],
                                 params["hd_attns"], params["emb_gen"])
    K_copy = params[f"e_k_{layer}"] + 0.0
    P_k_flat, K_new_k, cos_k, q_k = hdprompt_pallas(
        x_querry, params["enc_basis"], K_copy, w_cat)
    jax.block_until_ready((P_k_flat, K_new_k, cos_k, q_k))

    assert jnp.array_equal(q_k, q_ref)
    assert jnp.allclose(cos_k, cos_ref, atol=1e-3)         # exact integers in practice
    P_k = P_k_flat.reshape(B, e_p_length, emb_d)
    # bf16 w_cat -> tolerance-equal (not bitwise); +-1 operands stay exact.
    assert jnp.max(jnp.abs(P_k - P_ref)) <= 1e-2 * p_scale + 1e-3
    assert jnp.array_equal(K_new_k, Knew_ref)              # fused key update, exact

    # --- Full forward flow ----------------------------------------------------
    (p_return, loss, x_block_out, new_params) = hdprompt_forward(
        params, x_querry, layer, x_block)
    Ek, Ev = p_return
    jax.block_until_ready((Ek, Ev, x_block_out, new_params[f"e_k_{layer}"]))

    i = e_p_length // 2
    assert Ek.shape == (B, i, emb_d) and Ev.shape == (B, e_p_length - i, emb_d)
    assert jnp.max(jnp.abs(Ek - P_ref[:, :i, :])) <= 1e-2 * p_scale + 1e-3
    assert jnp.max(jnp.abs(Ev - P_ref[:, i:, :])) <= 1e-2 * p_scale + 1e-3
    assert jnp.array_equal(new_params[f"e_k_{layer}"], Knew_ref)
    assert jnp.allclose(x_block_out, x_block)
    assert loss == 0.0

    print("KERNEL_OK")
</pallas_src>

<mosaic_0001>
module attributes {stable_mosaic.version = 11 : i64} {
  func.func @hdprompt_kernel(%arg0: memref<8x128xf32, #tpu.memory_space<vmem>>, %arg1: memref<128x512xf32, #tpu.memory_space<vmem>>, %arg2: memref<16x512xf32, #tpu.memory_space<vmem>>, %arg3: memref<512x1024xbf16, #tpu.memory_space<vmem>>, %arg4: memref<8x1024xf32, #tpu.memory_space<vmem>>, %arg5: memref<16x512xf32, #tpu.memory_space<vmem>>, %arg6: memref<8x16xf32, #tpu.memory_space<vmem>>, %arg7: memref<8x512xf32, #tpu.memory_space<vmem>>) attributes {dimension_semantics = [], scalar_prefetch = 0 : i64, scratch_operands = 0 : i64, tpu.core_type = #tpu.core_type<tc>} {
    %c0 = arith.constant 0 : index
    %c0_0 = arith.constant 0 : index
    %0 = vector.load %arg0[%c0, %c0_0] : memref<8x128xf32, #tpu.memory_space<vmem>>, vector<8x128xf32>
    %c0_1 = arith.constant 0 : index
    %c0_2 = arith.constant 0 : index
    %1 = vector.load %arg1[%c0_1, %c0_2] : memref<128x512xf32, #tpu.memory_space<vmem>>, vector<128x512xf32>
    %cst = arith.constant dense<0.000000e+00> : vector<8x512xf32>
    %2 = tpu.matmul %0, %1, %cst {dimension_numbers = #tpu.dot_dimension_numbers<[1], [0], [0], [1], [0, 0, 1, 1], [], []>} : vector<8x128xf32>, vector<128x512xf32>, vector<8x512xf32> -> vector<8x512xf32>
    %cst_3 = arith.constant 0.000000e+00 : f32
    %3 = vector.broadcast %cst_3 : f32 to vector<8x512xf32>
    %4 = arith.cmpf ogt, %2, %3 : vector<8x512xf32>
    %cst_4 = arith.constant 1.000000e+00 : f32
    %cst_5 = arith.constant -1.000000e+00 : f32
    %5 = vector.broadcast %cst_4 : f32 to vector<8x512xf32>
    %6 = vector.broadcast %cst_5 : f32 to vector<8x512xf32>
    %7 = arith.select %4, %5, %6 : vector<8x512xi1>, vector<8x512xf32>
    %c0_6 = arith.constant 0 : index
    %c0_7 = arith.constant 0 : index
    %8 = vector.load %arg7[%c0_6, %c0_7] : memref<8x512xf32, #tpu.memory_space<vmem>>, vector<8x512xf32>
    tpu.vector_store %arg7[%c0_6, %c0_7], %7 {strides = array<i32>} : memref<8x512xf32, #tpu.memory_space<vmem>>, vector<8x512xf32>,
    %9 = arith.truncf %7 : vector<8x512xf32> to vector<8x512xbf16>
    %c0_8 = arith.constant 0 : index
    %c0_9 = arith.constant 0 : index
    %10 = vector.load %arg2[%c0_8, %c0_9] : memref<16x512xf32, #tpu.memory_space<vmem>>, vector<16x512xf32>
    %11 = arith.truncf %10 : vector<16x512xf32> to vector<16x512xbf16>
    %cst_10 = arith.constant dense<0.000000e+00> : vector<8x16xf32>
    %12 = tpu.matmul %9, %11, %cst_10 {dimension_numbers = #tpu.dot_dimension_numbers<[1], [1], [0], [0], [0, 0, 1, 0], [], []>} : vector<8x512xbf16>, vector<16x512xbf16>, vector<8x16xf32> -> vector<8x16xf32>
    %c0_11 = arith.constant 0 : index
    %c0_12 = arith.constant 0 : index
    %13 = vector.load %arg6[%c0_11, %c0_12] : memref<8x16xf32, #tpu.memory_space<vmem>>, vector<8x16xf32>
    tpu.vector_store %arg6[%c0_11, %c0_12], %12 {strides = array<i32>} : memref<8x16xf32, #tpu.memory_space<vmem>>, vector<8x16xf32>,
    %c0_13 = arith.constant 0 : index
    %c0_14 = arith.constant 0 : index
    %14 = vector.load %arg3[%c0_13, %c0_14] : memref<512x1024xbf16, #tpu.memory_space<vmem>>, vector<512x1024xbf16>
    %cst_15 = arith.constant dense<0.000000e+00> : vector<8x1024xf32>
    %15 = tpu.matmul %9, %14, %cst_15 {dimension_numbers = #tpu.dot_dimension_numbers<[1], [0], [0], [1], [0, 0, 1, 1], [], []>} : vector<8x512xbf16>, vector<512x1024xbf16>, vector<8x1024xf32> -> vector<8x1024xf32>
    %c0_16 = arith.constant 0 : index
    %c0_17 = arith.constant 0 : index
    %16 = vector.load %arg4[%c0_16, %c0_17] : memref<8x1024xf32, #tpu.memory_space<vmem>>, vector<8x1024xf32>
    tpu.vector_store %arg4[%c0_16, %c0_17], %15 {strides = array<i32>} : memref<8x1024xf32, #tpu.memory_space<vmem>>, vector<8x1024xf32>,
    %17 = tpu.iota {dimensions = array<i32: 1>} : vector<8x16xi32>
    %18 = arith.sitofp %17 : vector<8x16xi32> to vector<8x16xf32>
    %19 = tpu.iota {dimensions = array<i32: 0>} : vector<8x16xi32>
    %20 = arith.sitofp %19 : vector<8x16xi32> to vector<8x16xf32>
    %cst_18 = arith.constant dense<0xFF800000> : vector<8xf32>
    %21 = vector.multi_reduction <maximumf>, %12, %cst_18 [1] : vector<8x16xf32> to vector<8xf32>
    %22 = vector.shape_cast %21 : vector<8xf32> to vector<8x1xf32>
    %23 = vector.broadcast %22 : vector<8x1xf32> to vector<8x16xf32>
    %24 = arith.cmpf oge, %12, %23 : vector<8x16xf32>
    %cst_19 = arith.constant 1.600000e+01 : f32
    %25 = vector.broadcast %cst_19 : f32 to vector<8x16xf32>
    %26 = arith.select %24, %18, %25 : vector<8x16xi1>, vector<8x16xf32>
    %cst_20 = arith.constant dense<0x7F800000> : vector<8xf32>
    %27 = vector.multi_reduction <minimumf>, %26, %cst_20 [1] : vector<8x16xf32> to vector<8xf32>
    %28 = vector.shape_cast %27 : vector<8xf32> to vector<8x1xf32>
    %29 = vector.broadcast %28 : vector<8x1xf32> to vector<8x16xf32>
    %30 = arith.cmpf oeq, %18, %29 : vector<8x16xf32>
    %31 = arith.extui %30 : vector<8x16xi1> to vector<8x16xi32>
    %32 = arith.sitofp %31 : vector<8x16xi32> to vector<8x16xf32>
    %33 = arith.truncf %32 : vector<8x16xf32> to vector<8x16xbf16>
    %cst_21 = arith.constant dense<0.000000e+00> : vector<8x512xf32>
    %34 = tpu.matmul %33, %11, %cst_21 {dimension_numbers = #tpu.dot_dimension_numbers<[1], [0], [0], [1], [0, 0, 1, 1], [], []>} : vector<8x16xbf16>, vector<16x512xbf16>, vector<8x512xf32> -> vector<8x512xf32>
    %35 = arith.addf %34, %7 : vector<8x512xf32>
    %cst_22 = arith.constant 0.000000e+00 : f32
    %36 = vector.broadcast %cst_22 : f32 to vector<8x512xf32>
    %37 = arith.cmpf ogt, %35, %36 : vector<8x512xf32>
    %cst_23 = arith.constant 1.000000e+00 : f32
    %cst_24 = arith.constant -1.000000e+00 : f32
    %38 = vector.broadcast %cst_23 : f32 to vector<8x512xf32>
    %39 = vector.broadcast %cst_24 : f32 to vector<8x512xf32>
    %40 = arith.select %37, %38, %39 : vector<8x512xi1>, vector<8x512xf32>
    %cst_25 = arith.constant 0.000000e+00 : f32
    %41 = vector.broadcast %cst_25 : f32 to vector<8x16xf32>
    %42 = arith.cmpf ogt, %32, %41 : vector<8x16xf32>
    %cst_26 = arith.constant 1.000000e+00 : f32
    %43 = vector.broadcast %cst_26 : f32 to vector<8x16xf32>
    %44 = arith.addf %20, %43 : vector<8x16xf32>
    %cst_27 = arith.constant 0.000000e+00 : f32
    %45 = vector.broadcast %cst_27 : f32 to vector<8x16xf32>
    %46 = arith.select %42, %44, %45 : vector<8x16xi1>, vector<8x16xf32>
    %cst_28 = arith.constant dense<0xFF800000> : vector<16xf32>
    %47 = vector.multi_reduction <maximumf>, %46, %cst_28 [0] : vector<8x16xf32> to vector<16xf32>
    %48 = vector.shape_cast %47 : vector<16xf32> to vector<1x16xf32>
    %cst_29 = arith.constant 0.000000e+00 : f32
    %49 = vector.broadcast %cst_29 : f32 to vector<8x16xf32>
    %50 = arith.cmpf ogt, %32, %49 : vector<8x16xf32>
    %51 = vector.broadcast %48 : vector<1x16xf32> to vector<8x16xf32>
    %52 = arith.cmpf oge, %46, %51 : vector<8x16xf32>
    %53 = arith.andi %50, %52 : vector<8x16xi1>
    %54 = arith.extui %53 : vector<8x16xi1> to vector<8x16xi32>
    %55 = arith.sitofp %54 : vector<8x16xi32> to vector<8x16xf32>
    %56 = arith.subf %40, %34 : vector<8x512xf32>
    %57 = arith.truncf %56 : vector<8x512xf32> to vector<8x512xbf16>
    %58 = arith.truncf %55 : vector<8x16xf32> to vector<8x16xbf16>
    %cst_30 = arith.constant dense<0.000000e+00> : vector<16x512xf32>
    %59 = tpu.matmul %58, %57, %cst_30 {dimension_numbers = #tpu.dot_dimension_numbers<[0], [0], [1], [1], [0, 1, 1, 1], [], []>} : vector<8x16xbf16>, vector<8x512xbf16>, vector<16x512xf32> -> vector<16x512xf32>
    %60 = arith.addf %10, %59 : vector<16x512xf32>
    %c0_31 = arith.constant 0 : index
    %c0_32 = arith.constant 0 : index
    %61 = vector.load %arg5[%c0_31, %c0_32] : memref<16x512xf32, #tpu.memory_space<vmem>>, vector<16x512xf32>
    tpu.vector_store %arg5[%c0_31, %c0_32], %60 {strides = array<i32>} : memref<16x512xf32, #tpu.memory_space<vmem>>, vector<16x512xf32>,
    return
  }
}

</mosaic_0001>

<llo_original>
// kernel: tpu_custom_call.1
$region0: #{tpu_custom_call.1}
  #allocation0 [shape = 'u32[]', space=smem, size = 0x4, offset = 0x4, fixed_abs, tag = 'smem constant byte address 0x4 - core index']
  #allocation1 [shape = 'u32[72,128]{1,0:T(1,128)}', space=vmem, size = 0x9000, scoped, tag = 'internal scratch']
  %s0 = inlined_call_operand.vmem [shape: f32[8,128], index: 0, kind: input, shape index: {}]
  %s1 = inlined_call_operand.hbm [shape: f32[128,512], index: 1, kind: input, shape index: {}]
  %s2 = inlined_call_operand.hbm [shape: f32[16,512], index: 2, kind: input, shape index: {}, may-alias: {2,5}]
  %s3 = inlined_call_operand.hbm [shape: bf16[512,1024], index: 3, kind: input, shape index: {}]
  %s4 = inlined_call_operand.hbm [shape: f32[8,1024], index: 4, kind: output, shape index: {0}]
  %s5 = inlined_call_operand.hbm [shape: f32[16,512], index: 5, kind: output, shape index: {1}, may-alias: {2,5}]
  %s6 = inlined_call_operand.hbm [shape: f32[8,16], index: 6, kind: output, shape index: {2}]
  %s7 = inlined_call_operand.hbm [shape: f32[8,512], index: 7, kind: output, shape index: {3}]
  %8 = xla_tuple %s4, %s5, %s6, %s7
  %s9 = sld [smem:[#allocation0]]
  $region62: #{tpu_custom_call.1} parent=0
    _
  %s11 = ssub.s32 1, %s9
  %s12 = scalar_select 0, %s11, %s9
  $region1: #{tpu_custom_call.1} parent=0
    #allocation2 [shape = 'u8[262144]{0}', space=vmem, size = 0x40000, scoped, tag = 'input window, operand 1, single buffered']
    #allocation3 [shape = 's32[1]{0}', space=sflag, size = 0x4, scoped, tag = 'scoped memory for tpu_custom_call.1']
    #allocation4 [shape = 's32[1]{0}', space=sflag, size = 0x4, scoped, tag = 'scoped memory for tpu_custom_call.1']
    #allocation5 [shape = 'u8[32768]{0}', space=vmem, size = 0x8000, scoped, tag = 'input window, operand 2, single buffered']
    #allocation6 [shape = 's32[1]{0}', space=sflag, size = 0x4, scoped, tag = 'scoped memory for tpu_custom_call.1']
    #allocation7 [shape = 'u8[1048576]{0}', space=vmem, size = 0x100000, scoped, tag = 'input window, operand 3, single buffered']
    #allocation8 [shape = 'u8[32768]{0}', space=vmem, size = 0x8000, scoped, tag = 'output window, operand 0, single buffered']
    #allocation9 [shape = 'u8[32768]{0}', space=vmem, size = 0x8000, scoped, tag = 'output window, operand 1, single buffered']
    #allocation10 [shape = 's32[1]{0}', space=sflag, size = 0x4, scoped, tag = 'scoped memory for tpu_custom_call.1']
    #allocation11 [shape = 'u8[4096]{0}', space=vmem, size = 0x1000, scoped, tag = 'output window, operand 2, single buffered']
    #allocation12 [shape = 'u8[16384]{0}', space=vmem, size = 0x4000, scoped, tag = 'output window, operand 3, single buffered']
    #allocation13 [shape = 's32[1]{0}', space=sflag, size = 0x4, scoped, tag = 'scoped memory for tpu_custom_call.1']
    %13 = vsyncpa [#allocation3], 0
    %14 = vsyncpa [#allocation6], 0
    %15 = vsyncpa [#allocation4], 0
    %16 = vsyncpa [#allocation10], 0
    %17 = vsyncpa [#allocation13], 0
    // Predicated region
    $region2: #{tpu_custom_call.1} parent=1 // pred_check
      _
    $region3: #{tpu_custom_call.1} parent=1 // pred_check_branch
      %19 = sbr.rel (0) target = $region5
    $region4: #{tpu_custom_call.1} parent=1 // pred_region
      _
    $region5: #{tpu_custom_call.1} parent=1 // pred_fallthru
      _
    // Predicated region
    $region6: #{tpu_custom_call.1} parent=1 // pred_check
      _
    $region7: #{tpu_custom_call.1} parent=1 // pred_check_branch
      %21 = sbr.rel (0) target = $region9
    $region8: #{tpu_custom_call.1} parent=1 // pred_region
      %23 = vsyncadd [#allocation3], 0
      %s24 = sshll.u32 %s1, 4
      %s25 = int_to_ptr.hbm [resolvable:$true] %s24
      %s26 = sshll.u32 [#allocation2], 4
      %s27 = int_to_ptr.vmem [resolvable:$true] %s26
      %32 = dma.hbm_to_vmem [thread:$0]  %s25, 8192, %s27, [#allocation3], 512, 512, 32
    $region9: #{tpu_custom_call.1} parent=1 // pred_fallthru
      _
    // Predicated region
    $region10: #{tpu_custom_call.1} parent=1 // pred_check
      _
    $region11: #{tpu_custom_call.1} parent=1 // pred_check_branch
      %34 = sbr.rel (0) target = $region13
    $region12: #{tpu_custom_call.1} parent=1 // pred_region
      %36 = vsyncadd [#allocation6], 0
      %s37 = sshll.u32 %s2, 4
      %s38 = int_to_ptr.hbm [resolvable:$true] %s37
      %s39 = sshll.u32 [#allocation5], 4
      %s40 = int_to_ptr.vmem [resolvable:$true] %s39
      %45 = dma.hbm_to_vmem [thread:$0]  %s38, 1024, %s40, [#allocation6], 512, 512, 32
    $region13: #{tpu_custom_call.1} parent=1 // pred_fallthru
      _
    // Predicated region
    $region14: #{tpu_custom_call.1} parent=1 // pred_check
      _
    $region15: #{tpu_custom_call.1} parent=1 // pred_check_branch
      %47 = sbr.rel (0) target = $region17
    $region16: #{tpu_custom_call.1} parent=1 // pred_region
      %49 = vsyncadd [#allocation6], 0
      %s50 = sshll.u32 %s3, 4
      %s51 = int_to_ptr.hbm [resolvable:$true] %s50
      %s52 = sshll.u32 [#allocation7], 4
      %s53 = int_to_ptr.vmem [resolvable:$true] %s52
      %58 = dma.hbm_to_vmem [thread:$0]  %s51, 32768, %s53, [#allocation6], 512, 512, 32
    $region17: #{tpu_custom_call.1} parent=1 // pred_fallthru
      _
    // Predicated region
    $region18: #{tpu_custom_call.1} parent=1 // pred_check
      _
    $region19: #{tpu_custom_call.1} parent=1 // pred_check_branch
      %60 = sbr.rel (0) target = $region21
    $region20: #{tpu_custom_call.1} parent=1 // pred_region
      %62 = dma.done [#allocation3], 8192
    $region21: #{tpu_custom_call.1} parent=1 // pred_fallthru
      _
    // Predicated region
    $region22: #{tpu_custom_call.1} parent=1 // pred_check
      _
    $region23: #{tpu_custom_call.1} parent=1 // pred_check_branch
      %64 = sbr.rel (0) target = $region25
    $region24: #{tpu_custom_call.1} parent=1 // pred_region
      %66 = dma.done [#allocation6], 1024
    $region25: #{tpu_custom_call.1} parent=1 // pred_fallthru
      _
    // Predicated region
    $region26: #{tpu_custom_call.1} parent=1 // pred_check
      _
    $region27: #{tpu_custom_call.1} parent=1 // pred_check_branch
      %68 = sbr.rel (0) target = $region29
    $region28: #{tpu_custom_call.1} parent=1 // pred_region
      %70 = dma.done [#allocation6], 32768
    $region29: #{tpu_custom_call.1} parent=1 // pred_fallthru
      _
    %v72 = vld [vmem:[%s0] sm:$0xff]
    %v73 = vld [vmem:[#allocation2] sm:$0xff]
    %v74 = vld [vmem:[#allocation2 + $0x8] sm:$0xff]
    %v75 = vld [vmem:[#allocation2 + $0x10] sm:$0xff]
    %v76 = vld [vmem:[#allocation2 + $0x18] sm:$0xff]
    %v77 = vld [vmem:[#allocation2 + $0x20] sm:$0xff]
    %v78 = vld [vmem:[#allocation2 + $0x28] sm:$0xff]
    %v79 = vld [vmem:[#allocation2 + $0x30] sm:$0xff]
    %v80 = vld [vmem:[#allocation2 + $0x38] sm:$0xff]
    %v81 = vld [vmem:[#allocation2 + $0x40] sm:$0xff]
    %v82 = vld [vmem:[#allocation2 + $0x48] sm:$0xff]
    %v83 = vld [vmem:[#allocation2 + $0x50] sm:$0xff]
    %v84 = vld [vmem:[#allocation2 + $0x58] sm:$0xff]
    %v85 = vld [vmem:[#allocation2 + $0x60] sm:$0xff]
    %v86 = vld [vmem:[#allocation2 + $0x68] sm:$0xff]
    %v87 = vld [vmem:[#allocation2 + $0x70] sm:$0xff]
    %v88 = vld [vmem:[#allocation2 + $0x78] sm:$0xff]
    %v89 = vld [vmem:[#allocation2 + $0x80] sm:$0xff]
    %v90 = vld [vmem:[#allocation2 + $0x88] sm:$0xff]
    %v91 = vld [vmem:[#allocation2 + $0x90] sm:$0xff]
    %v92 = vld [vmem:[#allocation2 + $0x98] sm:$0xff]
    %v93 = vld [vmem:[#allocation2 + $0xa0] sm:$0xff]
    %v94 = vld [vmem:[#allocation2 + $0xa8] sm:$0xff]
    %v95 = vld [vmem:[#allocation2 + $0xb0] sm:$0xff]
    %v96 = vld [vmem:[#allocation2 + $0xb8] sm:$0xff]
    %v97 = vld [vmem:[#allocation2 + $0xc0] sm:$0xff]
    %v98 = vld [vmem:[#allocation2 + $0xc8] sm:$0xff]
    %v99 = vld [vmem:[#allocation2 + $0xd0] sm:$0xff]
    %v100 = vld [vmem:[#allocation2 + $0xd8] sm:$0xff]
    %v101 = vld [vmem:[#allocation2 + $0xe0] sm:$0xff]
    %v102 = vld [vmem:[#allocation2 + $0xe8] sm:$0xff]
    %v103 = vld [vmem:[#allocation2 + $0xf0] sm:$0xff]
    %v104 = vld [vmem:[#allocation2 + $0xf8] sm:$0xff]
    %v105 = vld [vmem:[#allocation2 + $0x100] sm:$0xff]
    %v106 = vld [vmem:[#allocation2 + $0x108] sm:$0xff]
    %v107 = vld [vmem:[#allocation2 + $0x110] sm:$0xff]
    %v108 = vld [vmem:[#allocation2 + $0x118] sm:$0xff]
    %v109 = vld [vmem:[#allocation2 + $0x120] sm:$0xff]
    %v110 = vld [vmem:[#allocation2 + $0x128] sm:$0xff]
    %v111 = vld [vmem:[#allocation2 + $0x130] sm:$0xff]
    %v112 = vld [vmem:[#allocation2 + $0x138] sm:$0xff]
    %v113 = vld [vmem:[#allocation2 + $0x140] sm:$0xff]
    %v114 = vld [vmem:[#allocation2 + $0x148] sm:$0xff]
    %v115 = vld [vmem:[#allocation2 + $0x150] sm:$0xff]
    %v116 = vld [vmem:[#allocation2 + $0x158] sm:$0xff]
    %v117 = vld [vmem:[#allocation2 + $0x160] sm:$0xff]
    %v118 = vld [vmem:[#allocation2 + $0x168] sm:$0xff]
    %v119 = vld [vmem:[#allocation2 + $0x170] sm:$0xff]
    %v120 = vld [vmem:[#allocation2 + $0x178] sm:$0xff]
    %v121 = vld [vmem:[#allocation2 + $0x180] sm:$0xff]
    %v122 = vld [vmem:[#allocation2 + $0x188] sm:$0xff]
    %v123 = vld [vmem:[#allocation2 + $0x190] sm:$0xff]
    %v124 = vld [vmem:[#allocation2 + $0x198] sm:$0xff]
    %v125 = vld [vmem:[#allocation2 + $0x1a0] sm:$0xff]
    %v126 = vld [vmem:[#allocation2 + $0x1a8] sm:$0xff]
    %v127 = vld [vmem:[#allocation2 + $0x1b0] sm:$0xff]
    %v128 = vld [vmem:[#allocation2 + $0x1b8] sm:$0xff]
    %v129 = vld [vmem:[#allocation2 + $0x1c0] sm:$0xff]
    %v130 = vld [vmem:[#allocation2 + $0x1c8] sm:$0xff]
    %v131 = vld [vmem:[#allocation2 + $0x1d0] sm:$0xff]
    %v132 = vld [vmem:[#allocation2 + $0x1d8] sm:$0xff]
    %v133 = vld [vmem:[#allocation2 + $0x1e0] sm:$0xff]
    %v134 = vld [vmem:[#allocation2 + $0x1e8] sm:$0xff]
    %v135 = vld [vmem:[#allocation2 + $0x1f0] sm:$0xff]
    %v136 = vld [vmem:[#allocation2 + $0x1f8] sm:$0xff]
    %137 = vmatpush.msra.mxu0 %v133
    %138 = vmatpush.msra.mxu0 %v129
    %139 = vmatpush.msra.mxu0 %v125
    %140 = vmatpush.msra.mxu0 %v121
    %141 = vmatpush.msra.mxu0 %v117
    %142 = vmatpush.msra.mxu0 %v113
    %143 = vmatpush.msra.mxu0 %v109
    %144 = vmatpush.msra.mxu0 %v105
    %145 = vmatpush.msra.mxu0 %v101
    %146 = vmatpush.msra.mxu0 %v97
    %147 = vmatpush.msra.mxu0 %v93
    %148 = vmatpush.msra.mxu0 %v89
    %149 = vmatpush.msra.mxu0 %v85
    %150 = vmatpush.msra.mxu0 %v81
    %151 = vmatpush.msra.mxu0 %v77
    %152 = vmatpush.msra.mxu0 %v73
    %153 = vmatmul.f32.gmra.mxu0 %v72
    %v154 = vpop.f32.mrf.mxu0
    %v155 = vadd.f32 0.0, %v154
    %156 = vdwg.mxu0
    %157 = vmatpush.msra.mxu0 %v134
    %158 = vmatpush.msra.mxu0 %v130
    %159 = vmatpush.msra.mxu0 %v126
    %160 = vmatpush.msra.mxu0 %v122
    %161 = vmatpush.msra.mxu0 %v118
    %162 = vmatpush.msra.mxu0 %v114
    %163 = vmatpush.msra.mxu0 %v110
    %164 = vmatpush.msra.mxu0 %v106
    %165 = vmatpush.msra.mxu0 %v102
    %166 = vmatpush.msra.mxu0 %v98
    %167 = vmatpush.msra.mxu0 %v94
    %168 = vmatpush.msra.mxu0 %v90
    %169 = vmatpush.msra.mxu0 %v86
    %170 = vmatpush.msra.mxu0 %v82
    %171 = vmatpush.msra.mxu0 %v78
    %172 = vmatpush.msra.mxu0 %v74
    %173 = vmatmul.f32.gmra.mxu0 %v72
    %v174 = vpop.f32.mrf.mxu0
    %v175 = vadd.f32 0.0, %v174
    %176 = vdwg.mxu0
    %177 = vmatpush.msra.mxu0 %v135
    %178 = vmatpush.msra.mxu0 %v131
    %179 = vmatpush.msra.mxu0 %v127
    %180 = vmatpush.msra.mxu0 %v123
    %181 = vmatpush.msra.mxu0 %v119
    %182 = vmatpush.msra.mxu0 %v115
    %183 = vmatpush.msra.mxu0 %v111
    %184 = vmatpush.msra.mxu0 %v107
    %185 = vmatpush.msra.mxu0 %v103
    %186 = vmatpush.msra.mxu0 %v99
    %187 = vmatpush.msra.mxu0 %v95
    %188 = vmatpush.msra.mxu0 %v91
    %189 = vmatpush.msra.mxu0 %v87
    %190 = vmatpush.msra.mxu0 %v83
    %191 = vmatpush.msra.mxu0 %v79
    %192 = vmatpush.msra.mxu0 %v75
    %193 = vmatmul.f32.gmra.mxu0 %v72
    %v194 = vpop.f32.mrf.mxu0
    %v195 = vadd.f32 0.0, %v194
    %196 = vdwg.mxu0
    %197 = vmatpush.msra.mxu0 %v136
    %198 = vmatpush.msra.mxu0 %v132
    %199 = vmatpush.msra.mxu0 %v128
    %200 = vmatpush.msra.mxu0 %v124
    %201 = vmatpush.msra.mxu0 %v120
    %202 = vmatpush.msra.mxu0 %v116
    %203 = vmatpush.msra.mxu0 %v112
    %204 = vmatpush.msra.mxu0 %v108
    %205 = vmatpush.msra.mxu0 %v104
    %206 = vmatpush.msra.mxu0 %v100
    %207 = vmatpush.msra.mxu0 %v96
    %208 = vmatpush.msra.mxu0 %v92
    %209 = vmatpush.msra.mxu0 %v88
    %210 = vmatpush.msra.mxu0 %v84
    %211 = vmatpush.msra.mxu0 %v80
    %212 = vmatpush.msra.mxu0 %v76
    %213 = vmatmul.f32.gmra.mxu0 %v72
    %v214 = vpop.f32.mrf.mxu0
    %v215 = vadd.f32 0.0, %v214
    %216 = vdwg.mxu0
    %vm217 = vcmp.gt.f32.partialorder %v155, 0.0
    %vm218 = vcmp.gt.f32.partialorder %v175, 0.0
    %vm219 = vcmp.gt.f32.partialorder %v195, 0.0
    %vm220 = vcmp.gt.f32.partialorder %v215, 0.0
    %v221 = vsel %vm217, 1.0, -1.0
    %v222 = vsel %vm218, 1.0, -1.0
    %v223 = vsel %vm219, 1.0, -1.0
    %v224 = vsel %vm220, 1.0, -1.0
    %225 = vst [vmem:[#allocation12] sm:$0xff] %v221
    %226 = vst [vmem:[#allocation12 + $0x8] sm:$0xff] %v222
    %227 = vst [vmem:[#allocation12 + $0x10] sm:$0xff] %v223
    %228 = vst [vmem:[#allocation12 + $0x18] sm:$0xff] %v224
    %v229 = vpack.c.bf16 %v221, %v221
    %v230 = vpack.c.bf16 %v222, %v222
    %v231 = vpack.c.bf16 %v223, %v223
    %v232 = vpack.c.bf16 %v224, %v224
    %v233 = vld [vmem:[#allocation5] sm:$0xff]
    %v234 = vld [vmem:[#allocation5 + $0x8] sm:$0xff]
    %v235 = vld [vmem:[#allocation5 + $0x10] sm:$0xff]
    %v236 = vld [vmem:[#allocation5 + $0x18] sm:$0xff]
    %v237 = vld [vmem:[#allocation5 + $0x20] sm:$0xff]
    %v238 = vld [vmem:[#allocation5 + $0x28] sm:$0xff]
    %v239 = vld [vmem:[#allocation5 + $0x30] sm:$0xff]
    %v240 = vld [vmem:[#allocation5 + $0x38] sm:$0xff]
    %v241 = vpack.c.bf16 %v237, %v233
    %v242 = vpack.c.bf16 %v238, %v234
    %v243 = vpack.c.bf16 %v239, %v235
    %v244 = vpack.c.bf16 %v240, %v236
    %245 = vmatpush.bf16.xpose.msra.mxu0 0
    %246 = vmatpush.bf16.xpose.msra.mxu0 0
    %247 = vmatpush.bf16.xpose.msra.mxu0 0
    %248 = vmatpush.bf16.xpose.msra.mxu0 0
    %249 = vmatpush.bf16.xpose.msra.mxu0 0
    %250 = vmatpush.bf16.xpose.msra.mxu0 0
    %251 = vmatpush.bf16.xpose.msra.mxu0 0
    %252 = vmatpush.bf16.xpose.msra.mxu0 %v241
    %253 = vmatmul.bf16.gmra.mxu0 %v229
    %v254 = vpop.f32.mrf.mxu0
    %v255 = vadd.f32 0.0, %v254
    %v256 = vpop.f32.mrf.mxu0
    %257 = vdwg.mxu0
    %258 = vmatpush.bf16.xpose.msra.mxu0 0
    %259 = vmatpush.bf16.xpose.msra.mxu0 0
    %260 = vmatpush.bf16.xpose.msra.mxu0 0
    %261 = vmatpush.bf16.xpose.msra.mxu0 0
    %262 = vmatpush.bf16.xpose.msra.mxu0 0
    %263 = vmatpush.bf16.xpose.msra.mxu0 0
    %264 = vmatpush.bf16.xpose.msra.mxu0 0
    %265 = vmatpush.bf16.xpose.msra.mxu0 %v242
    %266 = vmatmul.bf16.gmra.mxu0 %v230
    %v267 = vpop.f32.mrf.mxu0
    %v268 = vadd.f32 %v255, %v267
    %v269 = vpop.f32.mrf.mxu0
    %270 = vdwg.mxu0
    %271 = vmatpush.bf16.xpose.msra.mxu0 0
    %272 = vmatpush.bf16.xpose.msra.mxu0 0
    %273 = vmatpush.bf16.xpose.msra.mxu0 0
    %274 = vmatpush.bf16.xpose.msra.mxu0 0
    %275 = vmatpush.bf16.xpose.msra.mxu0 0
    %276 = vmatpush.bf16.xpose.msra.mxu0 0
    %277 = vmatpush.bf16.xpose.msra.mxu0 0
    %278 = vmatpush.bf16.xpose.msra.mxu0 %v243
    %279 = vmatmul.bf16.gmra.mxu0 %v231
    %v280 = vpop.f32.mrf.mxu0
    %v281 = vadd.f32 %v268, %v280
    %v282 = vpop.f32.mrf.mxu0
    %283 = vdwg.mxu0
    %284 = vmatpush.bf16.xpose.msra.mxu0 0
    %285 = vmatpush.bf16.xpose.msra.mxu0 0
    %286 = vmatpush.bf16.xpose.msra.mxu0 0
    %287 = vmatpush.bf16.xpose.msra.mxu0 0
    %288 = vmatpush.bf16.xpose.msra.mxu0 0
    %289 = vmatpush.bf16.xpose.msra.mxu0 0
    %290 = vmatpush.bf16.xpose.msra.mxu0 0
    %291 = vmatpush.bf16.xpose.msra.mxu0 %v244
    %292 = vmatmul.bf16.gmra.mxu0 %v232
    %v293 = vpop.f32.mrf.mxu0
    %v294 = vadd.f32 %v281, %v293
    %v295 = vpop.f32.mrf.mxu0
    %296 = vdwg.mxu0
    %vm297 = vcmask 130048
    %298 = vst.msk [vmem:[#allocation11] sm:$0xff] %vm297, %v294
    %v299 = vld [vmem:[#allocation7] sm:$0xff]
    %v300 = vld [vmem:[#allocation7 + $0x8] sm:$0xff]
    %v301 = vld [vmem:[#allocation7 + $0x10] sm:$0xff]
    %v302 = vld [vmem:[#allocation7 + $0x18] sm:$0xff]
    %v303 = vld [vmem:[#allocation7 + $0x20] sm:$0xff]
    %v304 = vld [vmem:[#allocation7 + $0x28] sm:$0xff]
    %v305 = vld [vmem:[#allocation7 + $0x30] sm:$0xff]
    %v306 = vld [vmem:[#allocation7 + $0x38] sm:$0xff]
    %v307 = vld [vmem:[#allocation7 + $0x40] sm:$0xff]
    %v308 = vld [vmem:[#allocation7 + $0x48] sm:$0xff]
    %v309 = vld [vmem:[#allocation7 + $0x50] sm:$0xff]
    %v310 = vld [vmem:[#allocation7 + $0x58] sm:$0xff]
    %v311 = vld [vmem:[#allocation7 + $0x60] sm:$0xff]
    %v312 = vld [vmem:[#allocation7 + $0x68] sm:$0xff]
    %v313 = vld [vmem:[#allocation7 + $0x70] sm:$0xff]
    %v314 = vld [vmem:[#allocation7 + $0x78] sm:$0xff]
    %v315 = vld [vmem:[#allocation7 + $0x80] sm:$0xff]
    %v316 = vld [vmem:[#allocation7 + $0x88] sm:$0xff]
    %v317 = vld [vmem:[#allocation7 + $0x90] sm:$0xff]
    %v318 = vld [vmem:[#allocation7 + $0x98] sm:$0xff]
    %v319 = vld [vmem:[#allocation7 + $0xa0] sm:$0xff]
    %v320 = vld [vmem:[#allocation7 + $0xa8] sm:$0xff]
    %v321 = vld [vmem:[#allocation7 + $0xb0] sm:$0xff]
    %v322 = vld [vmem:[#allocation7 + $0xb8] sm:$0xff]
    %v323 = vld [vmem:[#allocation7 + $0xc0] sm:$0xff]
    %v324 = vld [vmem:[#allocation7 + $0xc8] sm:$0xff]
    %v325 = vld [vmem:[#allocation7 + $0xd0] sm:$0xff]
    %v326 = vld [vmem:[#allocation7 + $0xd8] sm:$0xff]
    %v327 = vld [vmem:[#allocation7 + $0xe0] sm:$0xff]
    %v328 = vld [vmem:[#allocation7 + $0xe8] sm:$0xff]
    %v329 = vld [vmem:[#allocation7 + $0xf0] sm:$0xff]
    %v330 = vld [vmem:[#allocation7 + $0xf8] sm:$0xff]
    %v331 = vld [vmem:[#allocation7 + $0x100] sm:$0xff]
    %v332 = vld [vmem:[#allocation7 + $0x108] sm:$0xff]
    %v333 = vld [vmem:[#allocation7 + $0x110] sm:$0xff]
    %v334 = vld [vmem:[#allocation7 + $0x118] sm:$0xff]
    %v335 = vld [vmem:[#allocation7 + $0x120] sm:$0xff]
    %v336 = vld [vmem:[#allocation7 + $0x128] sm:$0xff]
    %v337 = vld [vmem:[#allocation7 + $0x130] sm:$0xff]
    %v338 = vld [vmem:[#allocation7 + $0x138] sm:$0xff]
    %v339 = vld [vmem:[#allocation7 + $0x140] sm:$0xff]
    %v340 = vld [vmem:[#allocation7 + $0x148] sm:$0xff]
    %v341 = vld [vmem:[#allocation7 + $0x150] sm:$0xff]
    %v342 = vld [vmem:[#allocation7 + $0x158] sm:$0xff]
    %v343 = vld [vmem:[#allocation7 + $0x160] sm:$0xff]
    %v344 = vld [vmem:[#allocation7 + $0x168] sm:$0xff]
    %v345 = vld [vmem:[#allocation7 + $0x170] sm:$0xff]
    %v346 = vld [vmem:[#allocation7 + $0x178] sm:$0xff]
    %v347 = vld [vmem:[#allocation7 + $0x180] sm:$0xff]
    %v348 = vld [vmem:[#allocation7 + $0x188] sm:$0xff]
    %v349 = vld [vmem:[#allocation7 + $0x190] sm:$0xff]
    %v350 = vld [vmem:[#allocation7 + $0x198] sm:$0xff]
    %v351 = vld [vmem:[#allocation7 + $0x1a0] sm:$0xff]
    %v352 = vld [vmem:[#allocation7 + $0x1a8] sm:$0xff]
    %v353 = vld [vmem:[#allocation7 + $0x1b0] sm:$0xff]
    %v354 = vld [vmem:[#allocation7 + $0x1b8] sm:$0xff]
    %v355 = vld [vmem:[#allocation7 + $0x1c0] sm:$0xff]
    %v356 = vld [vmem:[#allocation7 + $0x1c8] sm:$0xff]
    %v357 = vld [vmem:[#allocation7 + $0x1d0] sm:$0xff]
    %v358 = vld [vmem:[#allocation7 + $0x1d8] sm:$0xff]
    %v359 = vld [vmem:[#allocation7 + $0x1e0] sm:$0xff]
    %v360 = vld [vmem:[#allocation7 + $0x1e8] sm:$0xff]
    %v361 = vld [vmem:[#allocation7 + $0x1f0] sm:$0xff]
    %v362 = vld [vmem:[#allocation7 + $0x1f8] sm:$0xff]
    %v363 = vld [vmem:[#allocation7 + $0x200] sm:$0xff]
    %v364 = vld [vmem:[#allocation7 + $0x208] sm:$0xff]
    %v365 = vld [vmem:[#allocation7 + $0x210] sm:$0xff]
    %v366 = vld [vmem:[#allocation7 + $0x218] sm:$0xff]
    %v367 = vld [vmem:[#allocation7 + $0x220] sm:$0xff]
    %v368 = vld [vmem:[#allocation7 + $0x228] sm:$0xff]
    %v369 = vld [vmem:[#allocation7 + $0x230] sm:$0xff]
    %v370 = vld [vmem:[#allocation7 + $0x238] sm:$0xff]
    %v371 = vld [vmem:[#allocation7 + $0x240] sm:$0xff]
    %v372 = vld [vmem:[#allocation7 + $0x248] sm:$0xff]
    %v373 = vld [vmem:[#allocation7 + $0x250] sm:$0xff]
    %v374 = vld [vmem:[#allocation7 + $0x258] sm:$0xff]
    %v375 = vld [vmem:[#allocation7 + $0x260] sm:$0xff]
    %v376 = vld [vmem:[#allocation7 + $0x268] sm:$0xff]
    %v377 = vld [vmem:[#allocation7 + $0x270] sm:$0xff]
    %v378 = vld [vmem:[#allocation7 + $0x278] sm:$0xff]
    %v379 = vld [vmem:[#allocation7 + $0x280] sm:$0xff]
    %v380 = vld [vmem:[#allocation7 + $0x288] sm:$0xff]
    %v381 = vld [vmem:[#allocation7 + $0x290] sm:$0xff]
    %v382 = vld [vmem:[#allocation7 + $0x298] sm:$0xff]
    %v383 = vld [vmem:[#allocation7 + $0x2a0] sm:$0xff]
    %v384 = vld [vmem:[#allocation7 + $0x2a8] sm:$0xff]
    %v385 = vld [vmem:[#allocation7 + $0x2b0] sm:$0xff]
    %v386 = vld [vmem:[#allocation7 + $0x2b8] sm:$0xff]
    %v387 = vld [vmem:[#allocation7 + $0x2c0] sm:$0xff]
    %v388 = vld [vmem:[#allocation7 + $0x2c8] sm:$0xff]
    %v389 = vld [vmem:[#allocation7 + $0x2d0] sm:$0xff]
    %v390 = vld [vmem:[#allocation7 + $0x2d8] sm:$0xff]
    %v391 = vld [vmem:[#allocation7 + $0x2e0] sm:$0xff]
    %v392 = vld [vmem:[#allocation7 + $0x2e8] sm:$0xff]
    %v393 = vld [vmem:[#allocation7 + $0x2f0] sm:$0xff]
    %v394 = vld [vmem:[#allocation7 + $0x2f8] sm:$0xff]
    %v395 = vld [vmem:[#allocation7 + $0x300] sm:$0xff]
    %v396 = vld [vmem:[#allocation7 + $0x308] sm:$0xff]
    %v397 = vld [vmem:[#allocation7 + $0x310] sm:$0xff]
    %v398 = vld [vmem:[#allocation7 + $0x318] sm:$0xff]
    %v399 = vld [vmem:[#allocation7 + $0x320] sm:$0xff]
    %v400 = vld [vmem:[#allocation7 + $0x328] sm:$0xff]
    %v401 = vld [vmem:[#allocation7 + $0x330] sm:$0xff]
    %v402 = vld [vmem:[#allocation7 + $0x338] sm:$0xff]
    %v403 = vld [vmem:[#allocation7 + $0x340] sm:$0xff]
    %v404 = vld [vmem:[#allocation7 + $0x348] sm:$0xff]
    %v405 = vld [vmem:[#allocation7 + $0x350] sm:$0xff]
    %v406 = vld [vmem:[#allocation7 + $0x358] sm:$0xff]
    %v407 = vld [vmem:[#allocation7 + $0x360] sm:$0xff]
    %v408 = vld [vmem:[#allocation7 + $0x368] sm:$0xff]
    %v409 = vld [vmem:[#allocation7 + $0x370] sm:$0xff]
    %v410 = vld [vmem:[#allocation7 + $0x378] sm:$0xff]
    %v411 = vld [vmem:[#allocation7 + $0x380] sm:$0xff]
    %v412 = vld [vmem:[#allocation7 + $0x388] sm:$0xff]
    %v413 = vld [vmem:[#allocation7 + $0x390] sm:$0xff]
    %v414 = vld [vmem:[#allocation7 + $0x398] sm:$0xff]
    %v415 = vld [vmem:[#allocation7 + $0x3a0] sm:$0xff]
    %v416 = vld [vmem:[#allocation7 + $0x3a8] sm:$0xff]
    %v417 = vld [vmem:[#allocation7 + $0x3b0] sm:$0xff]
    %v418 = vld [vmem:[#allocation7 + $0x3b8] sm:$0xff]
    %v419 = vld [vmem:[#allocation7 + $0x3c0] sm:$0xff]
    %v420 = vld [vmem:[#allocation7 + $0x3c8] sm:$0xff]
    %v421 = vld [vmem:[#allocation7 + $0x3d0] sm:$0xff]
    %v422 = vld [vmem:[#allocation7 + $0x3d8] sm:$0xff]
    %v423 = vld [vmem:[#allocation7 + $0x3e0] sm:$0xff]
    %v424 = vld [vmem:[#allocation7 + $0x3e8] sm:$0xff]
    %v425 = vld [vmem:[#allocation7 + $0x3f0] sm:$0xff]
    %v426 = vld [vmem:[#allocation7 + $0x3f8] sm:$0xff]
    %v427 = vld [vmem:[#allocation7 + $0x400] sm:$0xff]
    %v428 = vld [vmem:[#allocation7 + $0x408] sm:$0xff]
    %v429 = vld [vmem:[#allocation7 + $0x410] sm:$0xff]
    %v430 = vld [vmem:[#allocation7 + $0x418] sm:$0xff]
    %v431 = vld [vmem:[#allocation7 + $0x420] sm:$0xff]
    %v432 = vld [vmem:[#allocation7 + $0x428] sm:$0xff]
    %v433 = vld [vmem:[#allocation7 + $0x430] sm:$0xff]
    %v434 = vld [vmem:[#allocation7 + $0x438] sm:$0xff]
    %v435 = vld [vmem:[#allocation7 + $0x440] sm:$0xff]
    %v436 = vld [vmem:[#allocation7 + $0x448] sm:$0xff]
    %v437 = vld [vmem:[#allocation7 + $0x450] sm:$0xff]
    %v438 = vld [vmem:[#allocation7 + $0x458] sm:$0xff]
    %v439 = vld [vmem:[#allocation7 + $0x460] sm:$0xff]
    %v440 = vld [vmem:[#allocation7 + $0x468] sm:$0xff]
    %v441 = vld [vmem:[#allocation7 + $0x470] sm:$0xff]
    %v442 = vld [vmem:[#allocation7 + $0x478] sm:$0xff]
    %v443 = vld [vmem:[#allocation7 + $0x480] sm:$0xff]
    %v444 = vld [vmem:[#allocation7 + $0x488] sm:$0xff]
    %v445 = vld [vmem:[#allocation7 + $0x490] sm:$0xff]
    %v446 = vld [vmem:[#allocation7 + $0x498] sm:$0xff]
    %v447 = vld [vmem:[#allocation7 + $0x4a0] sm:$0xff]
    %v448 = vld [vmem:[#allocation7 + $0x4a8] sm:$0xff]
    %v449 = vld [vmem:[#allocation7 + $0x4b0] sm:$0xff]
    %v450 = vld [vmem:[#allocation7 + $0x4b8] sm:$0xff]
    %v451 = vld [vmem:[#allocation7 + $0x4c0] sm:$0xff]
    %v452 = vld [vmem:[#allocation7 + $0x4c8] sm:$0xff]
    %v453 = vld [vmem:[#allocation7 + $0x4d0] sm:$0xff]
    %v454 = vld [vmem:[#allocation7 + $0x4d8] sm:$0xff]
    %v455 = vld [vmem:[#allocation7 + $0x4e0] sm:$0xff]
    %v456 = vld [vmem:[#allocation7 + $0x4e8] sm:$0xff]
    %v457 = vld [vmem:[#allocation7 + $0x4f0] sm:$0xff]
    %v458 = vld [vmem:[#allocation7 + $0x4f8] sm:$0xff]
    %v459 = vld [vmem:[#allocation7 + $0x500] sm:$0xff]
    %v460 = vld [vmem:[#allocation7 + $0x508] sm:$0xff]
    %v461 = vld [vmem:[#allocation7 + $0x510] sm:$0xff]
    %v462 = vld [vmem:[#allocation7 + $0x518] sm:$0xff]
    %v463 = vld [vmem:[#allocation7 + $0x520] sm:$0xff]
    %v464 = vld [vmem:[#allocation7 + $0x528] sm:$0xff]
    %v465 = vld [vmem:[#allocation7 + $0x530] sm:$0xff]
    %v466 = vld [vmem:[#allocation7 + $0x538] sm:$0xff]
    %v467 = vld [vmem:[#allocation7 + $0x540] sm:$0xff]
    %v468 = vld [vmem:[#allocation7 + $0x548] sm:$0xff]
    %v469 = vld [vmem:[#allocation7 + $0x550] sm:$0xff]
    %v470 = vld [vmem:[#allocation7 + $0x558] sm:$0xff]
    %v471 = vld [vmem:[#allocation7 + $0x560] sm:$0xff]
    %v472 = vld [vmem:[#allocation7 + $0x568] sm:$0xff]
    %v473 = vld [vmem:[#allocation7 + $0x570] sm:$0xff]
    %v474 = vld [vmem:[#allocation7 + $0x578] sm:$0xff]
    %v475 = vld [vmem:[#allocation7 + $0x580] sm:$0xff]
    %v476 = vld [vmem:[#allocation7 + $0x588] sm:$0xff]
    %v477 = vld [vmem:[#allocation7 + $0x590] sm:$0xff]
    %v478 = vld [vmem:[#allocation7 + $0x598] sm:$0xff]
    %v479 = vld [vmem:[#allocation7 + $0x5a0] sm:$0xff]
    %v480 = vld [vmem:[#allocation7 + $0x5a8] sm:$0xff]
    %v481 = vld [vmem:[#allocation7 + $0x5b0] sm:$0xff]
    %v482 = vld [vmem:[#allocation7 + $0x5b8] sm:$0xff]
    %v483 = vld [vmem:[#allocation7 + $0x5c0] sm:$0xff]
    %v484 = vld [vmem:[#allocation7 + $0x5c8] sm:$0xff]
    %v485 = vld [vmem:[#allocation7 + $0x5d0] sm:$0xff]
    %v486 = vld [vmem:[#allocation7 + $0x5d8] sm:$0xff]
    %v487 = vld [vmem:[#allocation7 + $0x5e0] sm:$0xff]
    %v488 = vld [vmem:[#allocation7 + $0x5e8] sm:$0xff]
    %v489 = vld [vmem:[#allocation7 + $0x5f0] sm:$0xff]
    %v490 = vld [vmem:[#allocation7 + $0x5f8] sm:$0xff]
    %v491 = vld [vmem:[#allocation7 + $0x600] sm:$0xff]
    %v492 = vld [vmem:[#allocation7 + $0x608] sm:$0xff]
    %v493 = vld [vmem:[#allocation7 + $0x610] sm:$0xff]
    %v494 = vld [vmem:[#allocation7 + $0x618] sm:$0xff]
    %v495 = vld [vmem:[#allocation7 + $0x620] sm:$0xff]
    %v496 = vld [vmem:[#allocation7 + $0x628] sm:$0xff]
    %v497 = vld [vmem:[#allocation7 + $0x630] sm:$0xff]
    %v498 = vld [vmem:[#allocation7 + $0x638] sm:$0xff]
    %v499 = vld [vmem:[#allocation7 + $0x640] sm:$0xff]
    %v500 = vld [vmem:[#allocation7 + $0x648] sm:$0xff]
    %v501 = vld [vmem:[#allocation7 + $0x650] sm:$0xff]
    %v502 = vld [vmem:[#allocation7 + $0x658] sm:$0xff]
    %v503 = vld [vmem:[#allocation7 + $0x660] sm:$0xff]
    %v504 = vld [vmem:[#allocation7 + $0x668] sm:$0xff]
    %v505 = vld [vmem:[#allocation7 + $0x670] sm:$0xff]
    %v506 = vld [vmem:[#allocation7 + $0x678] sm:$0xff]
    %v507 = vld [vmem:[#allocation7 + $0x680] sm:$0xff]
    %v508 = vld [vmem:[#allocation7 + $0x688] sm:$0xff]
    %v509 = vld [vmem:[#allocation7 + $0x690] sm:$0xff]
    %v510 = vld [vmem:[#allocation7 + $0x698] sm:$0xff]
    %v511 = vld [vmem:[#allocation7 + $0x6a0] sm:$0xff]
    %v512 = vld [vmem:[#allocation7 + $0x6a8] sm:$0xff]
    %v513 = vld [vmem:[#allocation7 + $0x6b0] sm:$0xff]
    %v514 = vld [vmem:[#allocation7 + $0x6b8] sm:$0xff]
    %v515 = vld [vmem:[#allocation7 + $0x6c0] sm:$0xff]
    %v516 = vld [vmem:[#allocation7 + $0x6c8] sm:$0xff]
    %v517 = vld [vmem:[#allocation7 + $0x6d0] sm:$0xff]
    %v518 = vld [vmem:[#allocation7 + $0x6d8] sm:$0xff]
    %v519 = vld [vmem:[#allocation7 + $0x6e0] sm:$0xff]
    %v520 = vld [vmem:[#allocation7 + $0x6e8] sm:$0xff]
    %v521 = vld [vmem:[#allocation7 + $0x6f0] sm:$0xff]
    %v522 = vld [vmem:[#allocation7 + $0x6f8] sm:$0xff]
    %v523 = vld [vmem:[#allocation7 + $0x700] sm:$0xff]
    %v524 = vld [vmem:[#allocation7 + $0x708] sm:$0xff]
    %v525 = vld [vmem:[#allocation7 + $0x710] sm:$0xff]
    %v526 = vld [vmem:[#allocation7 + $0x718] sm:$0xff]
    %v527 = vld [vmem:[#allocation7 + $0x720] sm:$0xff]
    %v528 = vld [vmem:[#allocation7 + $0x728] sm:$0xff]
    %v529 = vld [vmem:[#allocation7 + $0x730] sm:$0xff]
    %v530 = vld [vmem:[#allocation7 + $0x738] sm:$0xff]
    %v531 = vld [vmem:[#allocation7 + $0x740] sm:$0xff]
    %v532 = vld [vmem:[#allocation7 + $0x748] sm:$0xff]
    %v533 = vld [vmem:[#allocation7 + $0x750] sm:$0xff]
    %v534 = vld [vmem:[#allocation7 + $0x758] sm:$0xff]
    %v535 = vld [vmem:[#allocation7 + $0x760] sm:$0xff]
    %v536 = vld [vmem:[#allocation7 + $0x768] sm:$0xff]
    %v537 = vld [vmem:[#allocation7 + $0x770] sm:$0xff]
    %v538 = vld [vmem:[#allocation7 + $0x778] sm:$0xff]
    %v539 = vld [vmem:[#allocation7 + $0x780] sm:$0xff]
    %v540 = vld [vmem:[#allocation7 + $0x788] sm:$0xff]
    %v541 = vld [vmem:[#allocation7 + $0x790] sm:$0xff]
    %v542 = vld [vmem:[#allocation7 + $0x798] sm:$0xff]
    %v543 = vld [vmem:[#allocation7 + $0x7a0] sm:$0xff]
    %v544 = vld [vmem:[#allocation7 + $0x7a8] sm:$0xff]
    %v545 = vld [vmem:[#allocation7 + $0x7b0] sm:$0xff]
    %v546 = vld [vmem:[#allocation7 + $0x7b8] sm:$0xff]
    %v547 = vld [vmem:[#allocation7 + $0x7c0] sm:$0xff]
    %v548 = vld [vmem:[#allocation7 + $0x7c8] sm:$0xff]
    %v549 = vld [vmem:[#allocation7 + $0x7d0] sm:$0xff]
    %v550 = vld [vmem:[#allocation7 + $0x7d8] sm:$0xff]
    %v551 = vld [vmem:[#allocation7 + $0x7e0] sm:$0xff]
    %v552 = vld [vmem:[#allocation7 + $0x7e8] sm:$0xff]
    %v553 = vld [vmem:[#allocation7 + $0x7f0] sm:$0xff]
    %v554 = vld [vmem:[#allocation7 + $0x7f8] sm:$0xff]
    %v811 = vunpack.c.l.b16 %v299
    %v812 = vunpack.c.h.b16 %v299
    %v813 = vunpack.c.l.b16 %v300
    %v814 = vunpack.c.h.b16 %v300
    %v815 = vunpack.c.l.b16 %v301
    %v816 = vunpack.c.h.b16 %v301
    %v817 = vunpack.c.l.b16 %v302
    %v818 = vunpack.c.h.b16 %v302
    %v819 = vunpack.c.l.b16 %v303
    %v820 = vunpack.c.h.b16 %v303
    %v821 = vunpack.c.l.b16 %v304
    %v822 = vunpack.c.h.b16 %v304
    %v823 = vunpack.c.l.b16 %v305
    %v824 = vunpack.c.h.b16 %v305
    %v825 = vunpack.c.l.b16 %v306
    %v826 = vunpack.c.h.b16 %v306
    %v827 = vunpack.c.l.b16 %v307
    %v828 = vunpack.c.h.b16 %v307
    %v829 = vunpack.c.l.b16 %v308
    %v830 = vunpack.c.h.b16 %v308
    %v831 = vunpack.c.l.b16 %v309
    %v832 = vunpack.c.h.b16 %v309
    %v833 = vunpack.c.l.b16 %v310
    %v834 = vunpack.c.h.b16 %v310
    %v835 = vunpack.c.l.b16 %v311
    %v836 = vunpack.c.h.b16 %v311
    %v837 = vunpack.c.l.b16 %v312
    %v838 = vunpack.c.h.b16 %v312
    %v839 = vunpack.c.l.b16 %v313
    %v840 = vunpack.c.h.b16 %v313
    %v841 = vunpack.c.l.b16 %v314
    %v842 = vunpack.c.h.b16 %v314
    %v843 = vunpack.c.l.b16 %v315
    %v844 = vunpack.c.h.b16 %v315
    %v845 = vunpack.c.l.b16 %v316
    %v846 = vunpack.c.h.b16 %v316
    %v847 = vunpack.c.l.b16 %v317
    %v848 = vunpack.c.h.b16 %v317
    %v849 = vunpack.c.l.b16 %v318
    %v850 = vunpack.c.h.b16 %v318
    %v851 = vunpack.c.l.b16 %v319
    %v852 = vunpack.c.h.b16 %v319
    %v853 = vunpack.c.l.b16 %v320
    %v854 = vunpack.c.h.b16 %v320
    %v855 = vunpack.c.l.b16 %v321
    %v856 = vunpack.c.h.b16 %v321
    %v857 = vunpack.c.l.b16 %v322
    %v858 = vunpack.c.h.b16 %v322
    %v859 = vunpack.c.l.b16 %v323
    %v860 = vunpack.c.h.b16 %v323
    %v861 = vunpack.c.l.b16 %v324
    %v862 = vunpack.c.h.b16 %v324
    %v863 = vunpack.c.l.b16 %v325
    %v864 = vunpack.c.h.b16 %v325
    %v865 = vunpack.c.l.b16 %v326
    %v866 = vunpack.c.h.b16 %v326
    %v867 = vunpack.c.l.b16 %v327
    %v868 = vunpack.c.h.b16 %v327
    %v869 = vunpack.c.l.b16 %v328
    %v870 = vunpack.c.h.b16 %v328
    %v871 = vunpack.c.l.b16 %v329
    %v872 = vunpack.c.h.b16 %v329
    %v873 = vunpack.c.l.b16 %v330
    %v874 = vunpack.c.h.b16 %v330
    %v875 = vunpack.c.l.b16 %v331
    %v876 = vunpack.c.h.b16 %v331
    %v877 = vunpack.c.l.b16 %v332
    %v878 = vunpack.c.h.b16 %v332
    %v879 = vunpack.c.l.b16 %v333
    %v880 = vunpack.c.h.b16 %v333
    %v881 = vunpack.c.l.b16 %v334
    %v882 = vunpack.c.h.b16 %v334
    %v883 = vunpack.c.l.b16 %v335
    %v884 = vunpack.c.h.b16 %v335
    %v885 = vunpack.c.l.b16 %v336
    %v886 = vunpack.c.h.b16 %v336
    %v887 = vunpack.c.l.b16 %v337
    %v888 = vunpack.c.h.b16 %v337
    %v889 = vunpack.c.l.b16 %v338
    %v890 = vunpack.c.h.b16 %v338
    %v891 = vunpack.c.l.b16 %v339
    %v892 = vunpack.c.h.b16 %v339
    %v893 = vunpack.c.l.b16 %v340
    %v894 = vunpack.c.h.b16 %v340
    %v895 = vunpack.c.l.b16 %v341
    %v896 = vunpack.c.h.b16 %v341
    %v897 = vunpack.c.l.b16 %v342
    %v898 = vunpack.c.h.b16 %v342
    %v899 = vunpack.c.l.b16 %v343
    %v900 = vunpack.c.h.b16 %v343
    %v901 = vunpack.c.l.b16 %v344
    %v902 = vunpack.c.h.b16 %v344
    %v903 = vunpack.c.l.b16 %v345
    %v904 = vunpack.c.h.b16 %v345
    %v905 = vunpack.c.l.b16 %v346
    %v906 = vunpack.c.h.b16 %v346
    %v907 = vunpack.c.l.b16 %v347
    %v908 = vunpack.c.h.b16 %v347
    %v909 = vunpack.c.l.b16 %v348
    %v910 = vunpack.c.h.b16 %v348
    %v911 = vunpack.c.l.b16 %v349
    %v912 = vunpack.c.h.b16 %v349
    %v913 = vunpack.c.l.b16 %v350
    %v914 = vunpack.c.h.b16 %v350
    %v915 = vunpack.c.l.b16 %v351
    %v916 = vunpack.c.h.b16 %v351
    %v917 = vunpack.c.l.b16 %v352
    %v918 = vunpack.c.h.b16 %v352
    %v919 = vunpack.c.l.b16 %v353
    %v920 = vunpack.c.h.b16 %v353
    %v921 = vunpack.c.l.b16 %v354
    %v922 = vunpack.c.h.b16 %v354
    %v923 = vunpack.c.l.b16 %v355
    %v924 = vunpack.c.h.b16 %v355
    %v925 = vunpack.c.l.b16 %v356
    %v926 = vunpack.c.h.b16 %v356
    %v927 = vunpack.c.l.b16 %v357
    %v928 = vunpack.c.h.b16 %v357
    %v929 = vunpack.c.l.b16 %v358
    %v930 = vunpack.c.h.b16 %v358
    %v931 = vunpack.c.l.b16 %v359
    %v932 = vunpack.c.h.b16 %v359
    %v933 = vunpack.c.l.b16 %v360
    %v934 = vunpack.c.h.b16 %v360
    %v935 = vunpack.c.l.b16 %v361
    %v936 = vunpack.c.h.b16 %v361
    %v937 = vunpack.c.l.b16 %v362
    %v938 = vunpack.c.h.b16 %v362
    %v939 = vunpack.c.l.b16 %v363
    %v940 = vunpack.c.h.b16 %v363
    %v941 = vunpack.c.l.b16 %v364
    %v942 = vunpack.c.h.b16 %v364
    %v943 = vunpack.c.l.b16 %v365
    %v944 = vunpack.c.h.b16 %v365
    %v945 = vunpack.c.l.b16 %v366
    %v946 = vunpack.c.h.b16 %v366
    %v947 = vunpack.c.l.b16 %v367
    %v948 = vunpack.c.h.b16 %v367
    %v949 = vunpack.c.l.b16 %v368
    %v950 = vunpack.c.h.b16 %v368
    %v951 = vunpack.c.l.b16 %v369
    %v952 = vunpack.c.h.b16 %v369
    %v953 = vunpack.c.l.b16 %v370
    %v954 = vunpack.c.h.b16 %v370
    %v955 = vunpack.c.l.b16 %v371
    %v956 = vunpack.c.h.b16 %v371
    %v957 = vunpack.c.l.b16 %v372
    %v958 = vunpack.c.h.b16 %v372
    %v959 = vunpack.c.l.b16 %v373
    %v960 = vunpack.c.h.b16 %v373
    %v961 = vunpack.c.l.b16 %v374
    %v962 = vunpack.c.h.b16 %v374
    %v963 = vunpack.c.l.b16 %v375
    %v964 = vunpack.c.h.b16 %v375
    %v965 = vunpack.c.l.b16 %v376
    %v966 = vunpack.c.h.b16 %v376
    %v967 = vunpack.c.l.b16 %v377
    %v968 = vunpack.c.h.b16 %v377
    %v969 = vunpack.c.l.b16 %v378
    %v970 = vunpack.c.h.b16 %v378
    %v971 = vunpack.c.l.b16 %v379
    %v972 = vunpack.c.h.b16 %v379
    %v973 = vunpack.c.l.b16 %v380
    %v974 = vunpack.c.h.b16 %v380
    %v975 = vunpack.c.l.b16 %v381
    %v976 = vunpack.c.h.b16 %v381
    %v977 = vunpack.c.l.b16 %v382
    %v978 = vunpack.c.h.b16 %v382
    %v979 = vunpack.c.l.b16 %v383
    %v980 = vunpack.c.h.b16 %v383
    %v981 = vunpack.c.l.b16 %v384
    %v982 = vunpack.c.h.b16 %v384
    %v983 = vunpack.c.l.b16 %v385
    %v984 = vunpack.c.h.b16 %v385
    %v985 = vunpack.c.l.b16 %v386
    %v986 = vunpack.c.h.b16 %v386
    %v987 = vunpack.c.l.b16 %v387
    %v988 = vunpack.c.h.b16 %v387
    %v989 = vunpack.c.l.b16 %v388
    %v990 = vunpack.c.h.b16 %v388
    %v991 = vunpack.c.l.b16 %v389
    %v992 = vunpack.c.h.b16 %v389
    %v993 = vunpack.c.l.b16 %v390
    %v994 = vunpack.c.h.b16 %v390
    %v995 = vunpack.c.l.b16 %v391
    %v996 = vunpack.c.h.b16 %v391
    %v997 = vunpack.c.l.b16 %v392
    %v998 = vunpack.c.h.b16 %v392
    %v999 = vunpack.c.l.b16 %v393
    %v1000 = vunpack.c.h.b16 %v393
    %v1001 = vunpack.c.l.b16 %v394
    %v1002 = vunpack.c.h.b16 %v394
    %v1003 = vunpack.c.l.b16 %v395
    %v1004 = vunpack.c.h.b16 %v395
    %v1005 = vunpack.c.l.b16 %v396
    %v1006 = vunpack.c.h.b16 %v396
    %v1007 = vunpack.c.l.b16 %v397
    %v1008 = vunpack.c.h.b16 %v397
    %v1009 = vunpack.c.l.b16 %v398
    %v1010 = vunpack.c.h.b16 %v398
    %v1011 = vunpack.c.l.b16 %v399
    %v1012 = vunpack.c.h.b16 %v399
    %v1013 = vunpack.c.l.b16 %v400
    %v1014 = vunpack.c.h.b16 %v400
    %v1015 = vunpack.c.l.b16 %v401
    %v1016 = vunpack.c.h.b16 %v401
    %v1017 = vunpack.c.l.b16 %v402
    %v1018 = vunpack.c.h.b16 %v402
    %v1019 = vunpack.c.l.b16 %v403
    %v1020 = vunpack.c.h.b16 %v403
    %v1021 = vunpack.c.l.b16 %v404
    %v1022 = vunpack.c.h.b16 %v404
    %v1023 = vunpack.c.l.b16 %v405
    %v1024 = vunpack.c.h.b16 %v405
    %v1025 = vunpack.c.l.b16 %v406
    %v1026 = vunpack.c.h.b16 %v406
    %v1027 = vunpack.c.l.b16 %v407
    %v1028 = vunpack.c.h.b16 %v407
    %v1029 = vunpack.c.l.b16 %v408
    %v1030 = vunpack.c.h.b16 %v408
    %v1031 = vunpack.c.l.b16 %v409
    %v1032 = vunpack.c.h.b16 %v409
    %v1033 = vunpack.c.l.b16 %v410
    %v1034 = vunpack.c.h.b16 %v410
    %v1035 = vunpack.c.l.b16 %v411
    %v1036 = vunpack.c.h.b16 %v411
    %v1037 = vunpack.c.l.b16 %v412
    %v1038 = vunpack.c.h.b16 %v412
    %v1039 = vunpack.c.l.b16 %v413
    %v1040 = vunpack.c.h.b16 %v413
    %v1041 = vunpack.c.l.b16 %v414
    %v1042 = vunpack.c.h.b16 %v414
    %v1043 = vunpack.c.l.b16 %v415
    %v1044 = vunpack.c.h.b16 %v415
    %v1045 = vunpack.c.l.b16 %v416
    %v1046 = vunpack.c.h.b16 %v416
    %v1047 = vunpack.c.l.b16 %v417
    %v1048 = vunpack.c.h.b16 %v417
    %v1049 = vunpack.c.l.b16 %v418
    %v1050 = vunpack.c.h.b16 %v418
    %v1051 = vunpack.c.l.b16 %v419
    %v1052 = vunpack.c.h.b16 %v419
    %v1053 = vunpack.c.l.b16 %v420
    %v1054 = vunpack.c.h.b16 %v420
    %v1055 = vunpack.c.l.b16 %v421
    %v1056 = vunpack.c.h.b16 %v421
    %v1057 = vunpack.c.l.b16 %v422
    %v1058 = vunpack.c.h.b16 %v422
    %v1059 = vunpack.c.l.b16 %v423
    %v1060 = vunpack.c.h.b16 %v423
    %v1061 = vunpack.c.l.b16 %v424
    %v1062 = vunpack.c.h.b16 %v424
    %v1063 = vunpack.c.l.b16 %v425
    %v1064 = vunpack.c.h.b16 %v425
    %v1065 = vunpack.c.l.b16 %v426
    %v1066 = vunpack.c.h.b16 %v426
    %v1067 = vunpack.c.l.b16 %v427
    %v1068 = vunpack.c.h.b16 %v427
    %v1069 = vunpack.c.l.b16 %v428
    %v1070 = vunpack.c.h.b16 %v428
    %v1071 = vunpack.c.l.b16 %v429
    %v1072 = vunpack.c.h.b16 %v429
    %v1073 = vunpack.c.l.b16 %v430
    %v1074 = vunpack.c.h.b16 %v430
    %v1075 = vunpack.c.l.b16 %v431
    %v1076 = vunpack.c.h.b16 %v431
    %v1077 = vunpack.c.l.b16 %v432
    %v1078 = vunpack.c.h.b16 %v432
    %v1079 = vunpack.c.l.b16 %v433
    %v1080 = vunpack.c.h.b16 %v433
    %v1081 = vunpack.c.l.b16 %v434
    %v1082 = vunpack.c.h.b16 %v434
    %v1083 = vunpack.c.l.b16 %v435
    %v1084 = vunpack.c.h.b16 %v435
    %v1085 = vunpack.c.l.b16 %v436
    %v1086 = vunpack.c.h.b16 %v436
    %v1087 = vunpack.c.l.b16 %v437
    %v1088 = vunpack.c.h.b16 %v437
    %v1089 = vunpack.c.l.b16 %v438
    %v1090 = vunpack.c.h.b16 %v438
    %v1091 = vunpack.c.l.b16 %v439
    %v1092 = vunpack.c.h.b16 %v439
    %v1093 = vunpack.c.l.b16 %v440
    %v1094 = vunpack.c.h.b16 %v440
    %v1095 = vunpack.c.l.b16 %v441
    %v1096 = vunpack.c.h.b16 %v441
    %v1097 = vunpack.c.l.b16 %v442
    %v1098 = vunpack.c.h.b16 %v442
    %v1099 = vunpack.c.l.b16 %v443
    %v1100 = vunpack.c.h.b16 %v443
    %v1101 = vunpack.c.l.b16 %v444
    %v1102 = vunpack.c.h.b16 %v444
    %v1103 = vunpack.c.l.b16 %v445
    %v1104 = vunpack.c.h.b16 %v445
    %v1105 = vunpack.c.l.b16 %v446
    %v1106 = vunpack.c.h.b16 %v446
    %v1107 = vunpack.c.l.b16 %v447
    %v1108 = vunpack.c.h.b16 %v447
    %v1109 = vunpack.c.l.b16 %v448
    %v1110 = vunpack.c.h.b16 %v448
    %v1111 = vunpack.c.l.b16 %v449
    %v1112 = vunpack.c.h.b16 %v449
    %v1113 = vunpack.c.l.b16 %v450
    %v1114 = vunpack.c.h.b16 %v450
    %v1115 = vunpack.c.l.b16 %v451
    %v1116 = vunpack.c.h.b16 %v451
    %v1117 = vunpack.c.l.b16 %v452
    %v1118 = vunpack.c.h.b16 %v452
    %v1119 = vunpack.c.l.b16 %v453
    %v1120 = vunpack.c.h.b16 %v453
    %v1121 = vunpack.c.l.b16 %v454
    %v1122 = vunpack.c.h.b16 %v454
    %v1123 = vunpack.c.l.b16 %v455
    %v1124 = vunpack.c.h.b16 %v455
    %v1125 = vunpack.c.l.b16 %v456
    %v1126 = vunpack.c.h.b16 %v456
    %v1127 = vunpack.c.l.b16 %v457
    %v1128 = vunpack.c.h.b16 %v457
    %v1129 = vunpack.c.l.b16 %v458
    %v1130 = vunpack.c.h.b16 %v458
    %v1131 = vunpack.c.l.b16 %v459
    %v1132 = vunpack.c.h.b16 %v459
    %v1133 = vunpack.c.l.b16 %v460
    %v1134 = vunpack.c.h.b16 %v460
    %v1135 = vunpack.c.l.b16 %v461
    %v1136 = vunpack.c.h.b16 %v461
    %v1137 = vunpack.c.l.b16 %v462
    %v1138 = vunpack.c.h.b16 %v462
    %v1139 = vunpack.c.l.b16 %v463
    %v1140 = vunpack.c.h.b16 %v463
    %v1141 = vunpack.c.l.b16 %v464
    %v1142 = vunpack.c.h.b16 %v464
    %v1143 = vunpack.c.l.b16 %v465
    %v1144 = vunpack.c.h.b16 %v465
    %v1145 = vunpack.c.l.b16 %v466
    %v1146 = vunpack.c.h.b16 %v466
    %v1147 = vunpack.c.l.b16 %v467
    %v1148 = vunpack.c.h.b16 %v467
    %v1149 = vunpack.c.l.b16 %v468
    %v1150 = vunpack.c.h.b16 %v468
    %v1151 = vunpack.c.l.b16 %v469
    %v1152 = vunpack.c.h.b16 %v469
    %v1153 = vunpack.c.l.b16 %v470
    %v1154 = vunpack.c.h.b16 %v470
    %v1155 = vunpack.c.l.b16 %v471
    %v1156 = vunpack.c.h.b16 %v471
    %v1157 = vunpack.c.l.b16 %v472
    %v1158 = vunpack.c.h.b16 %v472
    %v1159 = vunpack.c.l.b16 %v473
    %v1160 = vunpack.c.h.b16 %v473
    %v1161 = vunpack.c.l.b16 %v474
    %v1162 = vunpack.c.h.b16 %v474
    %v1163 = vunpack.c.l.b16 %v475
    %v1164 = vunpack.c.h.b16 %v475
    %v1165 = vunpack.c.l.b16 %v476
    %v1166 = vunpack.c.h.b16 %v476
    %v1167 = vunpack.c.l.b16 %v477
    %v1168 = vunpack.c.h.b16 %v477
    %v1169 = vunpack.c.l.b16 %v478
    %v1170 = vunpack.c.h.b16 %v478
    %v1171 = vunpack.c.l.b16 %v479
    %v1172 = vunpack.c.h.b16 %v479
    %v1173 = vunpack.c.l.b16 %v480
    %v1174 = vunpack.c.h.b16 %v480
    %v1175 = vunpack.c.l.b16 %v481
    %v1176 = vunpack.c.h.b16 %v481
    %v1177 = vunpack.c.l.b16 %v482
    %v1178 = vunpack.c.h.b16 %v482
    %v1179 = vunpack.c.l.b16 %v483
    %v1180 = vunpack.c.h.b16 %v483
    %v1181 = vunpack.c.l.b16 %v484
    %v1182 = vunpack.c.h.b16 %v484
    %v1183 = vunpack.c.l.b16 %v485
    %v1184 = vunpack.c.h.b16 %v485
    %v1185 = vunpack.c.l.b16 %v486
    %v1186 = vunpack.c.h.b16 %v486
    %v1187 = vunpack.c.l.b16 %v487
    %v1188 = vunpack.c.h.b16 %v487
    %v1189 = vunpack.c.l.b16 %v488
    %v1190 = vunpack.c.h.b16 %v488
    %v1191 = vunpack.c.l.b16 %v489
    %v1192 = vunpack.c.h.b16 %v489
    %v1193 = vunpack.c.l.b16 %v490
    %v1194 = vunpack.c.h.b16 %v490
    %v1195 = vunpack.c.l.b16 %v491
    %v1196 = vunpack.c.h.b16 %v491
    %v1197 = vunpack.c.l.b16 %v492
    %v1198 = vunpack.c.h.b16 %v492
    %v1199 = vunpack.c.l.b16 %v493
    %v1200 = vunpack.c.h.b16 %v493
    %v1201 = vunpack.c.l.b16 %v494
    %v1202 = vunpack.c.h.b16 %v494
    %v1203 = vunpack.c.l.b16 %v495
    %v1204 = vunpack.c.h.b16 %v495
    %v1205 = vunpack.c.l.b16 %v496
    %v1206 = vunpack.c.h.b16 %v496
    %v1207 = vunpack.c.l.b16 %v497
    %v1208 = vunpack.c.h.b16 %v497
    %v1209 = vunpack.c.l.b16 %v498
    %v1210 = vunpack.c.h.b16 %v498
    %v1211 = vunpack.c.l.b16 %v499
    %v1212 = vunpack.c.h.b16 %v499
    %v1213 = vunpack.c.l.b16 %v500
    %v1214 = vunpack.c.h.b16 %v500
    %v1215 = vunpack.c.l.b16 %v501
    %v1216 = vunpack.c.h.b16 %v501
    %v1217 = vunpack.c.l.b16 %v502
    %v1218 = vunpack.c.h.b16 %v502
    %v1219 = vunpack.c.l.b16 %v503
    %v1220 = vunpack.c.h.b16 %v503
    %v1221 = vunpack.c.l.b16 %v504
    %v1222 = vunpack.c.h.b16 %v504
    %v1223 = vunpack.c.l.b16 %v505
    %v1224 = vunpack.c.h.b16 %v505
    %v1225 = vunpack.c.l.b16 %v506
    %v1226 = vunpack.c.h.b16 %v506
    %v1227 = vunpack.c.l.b16 %v507
    %v1228 = vunpack.c.h.b16 %v507
    %v1229 = vunpack.c.l.b16 %v508
    %v1230 = vunpack.c.h.b16 %v508
    %v1231 = vunpack.c.l.b16 %v509
    %v1232 = vunpack.c.h.b16 %v509
    %v1233 = vunpack.c.l.b16 %v510
    %v1234 = vunpack.c.h.b16 %v510
    %v1235 = vunpack.c.l.b16 %v511
    %v1236 = vunpack.c.h.b16 %v511
    %v1237 = vunpack.c.l.b16 %v512
    %v1238 = vunpack.c.h.b16 %v512
    %v1239 = vunpack.c.l.b16 %v513
    %v1240 = vunpack.c.h.b16 %v513
    %v1241 = vunpack.c.l.b16 %v514
    %v1242 = vunpack.c.h.b16 %v514
    %v1243 = vunpack.c.l.b16 %v515
    %v1244 = vunpack.c.h.b16 %v515
    %v1245 = vunpack.c.l.b16 %v516
    %v1246 = vunpack.c.h.b16 %v516
    %v1247 = vunpack.c.l.b16 %v517
    %v1248 = vunpack.c.h.b16 %v517
    %v1249 = vunpack.c.l.b16 %v518
    %v1250 = vunpack.c.h.b16 %v518
    %v1251 = vunpack.c.l.b16 %v519
    %v1252 = vunpack.c.h.b16 %v519
    %v1253 = vunpack.c.l.b16 %v520
    %v1254 = vunpack.c.h.b16 %v520
    %v1255 = vunpack.c.l.b16 %v521
    %v1256 = vunpack.c.h.b16 %v521
    %v1257 = vunpack.c.l.b16 %v522
    %v1258 = vunpack.c.h.b16 %v522
    %v1259 = vunpack.c.l.b16 %v523
    %v1260 = vunpack.c.h.b16 %v523
    %v1261 = vunpack.c.l.b16 %v524
    %v1262 = vunpack.c.h.b16 %v524
    %v1263 = vunpack.c.l.b16 %v525
    %v1264 = vunpack.c.h.b16 %v525
    %v1265 = vunpack.c.l.b16 %v526
    %v1266 = vunpack.c.h.b16 %v526
    %v1267 = vunpack.c.l.b16 %v527
    %v1268 = vunpack.c.h.b16 %v527
    %v1269 = vunpack.c.l.b16 %v528
    %v1270 = vunpack.c.h.b16 %v528
    %v1271 = vunpack.c.l.b16 %v529
    %v1272 = vunpack.c.h.b16 %v529
    %v1273 = vunpack.c.l.b16 %v530
    %v1274 = vunpack.c.h.b16 %v530
    %v1275 = vunpack.c.l.b16 %v531
    %v1276 = vunpack.c.h.b16 %v531
    %v1277 = vunpack.c.l.b16 %v532
    %v1278 = vunpack.c.h.b16 %v532
    %v1279 = vunpack.c.l.b16 %v533
    %v1280 = vunpack.c.h.b16 %v533
    %v1281 = vunpack.c.l.b16 %v534
    %v1282 = vunpack.c.h.b16 %v534
    %v1283 = vunpack.c.l.b16 %v535
    %v1284 = vunpack.c.h.b16 %v535
    %v1285 = vunpack.c.l.b16 %v536
    %v1286 = vunpack.c.h.b16 %v536
    %v1287 = vunpack.c.l.b16 %v537
    %v1288 = vunpack.c.h.b16 %v537
    %v1289 = vunpack.c.l.b16 %v538
    %v1290 = vunpack.c.h.b16 %v538
    %v1291 = vunpack.c.l.b16 %v539
    %v1292 = vunpack.c.h.b16 %v539
    %v1293 = vunpack.c.l.b16 %v540
    %v1294 = vunpack.c.h.b16 %v540
    %v1295 = vunpack.c.l.b16 %v541
    %v1296 = vunpack.c.h.b16 %v541
    %v1297 = vunpack.c.l.b16 %v542
    %v1298 = vunpack.c.h.b16 %v542
    %v1299 = vunpack.c.l.b16 %v543
    %v1300 = vunpack.c.h.b16 %v543
    %v1301 = vunpack.c.l.b16 %v544
    %v1302 = vunpack.c.h.b16 %v544
    %v1303 = vunpack.c.l.b16 %v545
    %v1304 = vunpack.c.h.b16 %v545
    %v1305 = vunpack.c.l.b16 %v546
    %v1306 = vunpack.c.h.b16 %v546
    %v1307 = vunpack.c.l.b16 %v547
    %v1308 = vunpack.c.h.b16 %v547
    %v1309 = vunpack.c.l.b16 %v548
    %v1310 = vunpack.c.h.b16 %v548
    %v1311 = vunpack.c.l.b16 %v549
    %v1312 = vunpack.c.h.b16 %v549
    %v1313 = vunpack.c.l.b16 %v550
    %v1314 = vunpack.c.h.b16 %v550
    %v1315 = vunpack.c.l.b16 %v551
    %v1316 = vunpack.c.h.b16 %v551
    %v1317 = vunpack.c.l.b16 %v552
    %v1318 = vunpack.c.h.b16 %v552
    %v1319 = vunpack.c.l.b16 %v553
    %v1320 = vunpack.c.h.b16 %v553
    %v1321 = vunpack.c.l.b16 %v554
    %v1322 = vunpack.c.h.b16 %v554
    %v1323 = vpack.c.b16 %v819, %v811
    %v1324 = vpack.c.b16 %v820, %v812
    %v1325 = vpack.c.b16 %v821, %v813
    %v1326 = vpack.c.b16 %v822, %v814
    %v1327 = vpack.c.b16 %v823, %v815
    %v1328 = vpack.c.b16 %v824, %v816
    %v1329 = vpack.c.b16 %v825, %v817
    %v1330 = vpack.c.b16 %v826, %v818
    %v1331 = vpack.c.b16 %v835, %v827
    %v1332 = vpack.c.b16 %v836, %v828
    %v1333 = vpack.c.b16 %v837, %v829
    %v1334 = vpack.c.b16 %v838, %v830
    %v1335 = vpack.c.b16 %v839, %v831
    %v1336 = vpack.c.b16 %v840, %v832
    %v1337 = vpack.c.b16 %v841, %v833
    %v1338 = vpack.c.b16 %v842, %v834
    %v1339 = vpack.c.b16 %v851, %v843
    %v1340 = vpack.c.b16 %v852, %v844
    %v1341 = vpack.c.b16 %v853, %v845
    %v1342 = vpack.c.b16 %v854, %v846
    %v1343 = vpack.c.b16 %v855, %v847
    %v1344 = vpack.c.b16 %v856, %v848
    %v1345 = vpack.c.b16 %v857, %v849
    %v1346 = vpack.c.b16 %v858, %v850
    %v1347 = vpack.c.b16 %v867, %v859
    %v1348 = vpack.c.b16 %v868, %v860
    %v1349 = vpack.c.b16 %v869, %v861
    %v1350 = vpack.c.b16 %v870, %v862
    %v1351 = vpack.c.b16 %v871, %v863
    %v1352 = vpack.c.b16 %v872, %v864
    %v1353 = vpack.c.b16 %v873, %v865
    %v1354 = vpack.c.b16 %v874, %v866
    %v1355 = vpack.c.b16 %v883, %v875
    %v1356 = vpack.c.b16 %v884, %v876
    %v1357 = vpack.c.b16 %v885, %v877
    %v1358 = vpack.c.b16 %v886, %v878
    %v1359 = vpack.c.b16 %v887, %v879
    %v1360 = vpack.c.b16 %v888, %v880
    %v1361 = vpack.c.b16 %v889, %v881
    %v1362 = vpack.c.b16 %v890, %v882
    %v1363 = vpack.c.b16 %v899, %v891
    %v1364 = vpack.c.b16 %v900, %v892
    %v1365 = vpack.c.b16 %v901, %v893
    %v1366 = vpack.c.b16 %v902, %v894
    %v1367 = vpack.c.b16 %v903, %v895
    %v1368 = vpack.c.b16 %v904, %v896
    %v1369 = vpack.c.b16 %v905, %v897
    %v1370 = vpack.c.b16 %v906, %v898
    %v1371 = vpack.c.b16 %v915, %v907
    %v1372 = vpack.c.b16 %v916, %v908
    %v1373 = vpack.c.b16 %v917, %v909
    %v1374 = vpack.c.b16 %v918, %v910
    %v1375 = vpack.c.b16 %v919, %v911
    %v1376 = vpack.c.b16 %v920, %v912
    %v1377 = vpack.c.b16 %v921, %v913
    %v1378 = vpack.c.b16 %v922, %v914
    %v1379 = vpack.c.b16 %v931, %v923
    %v1380 = vpack.c.b16 %v932, %v924
    %v1381 = vpack.c.b16 %v933, %v925
    %v1382 = vpack.c.b16 %v934, %v926
    %v1383 = vpack.c.b16 %v935, %v927
    %v1384 = vpack.c.b16 %v936, %v928
    %v1385 = vpack.c.b16 %v937, %v929
    %v1386 = vpack.c.b16 %v938, %v930
    %v1387 = vpack.c.b16 %v947, %v939
    %v1388 = vpack.c.b16 %v948, %v940
    %v1389 = vpack.c.b16 %v949, %v941
    %v1390 = vpack.c.b16 %v950, %v942
    %v1391 = vpack.c.b16 %v951, %v943
    %v1392 = vpack.c.b16 %v952, %v944
    %v1393 = vpack.c.b16 %v953, %v945
    %v1394 = vpack.c.b16 %v954, %v946
    %v1395 = vpack.c.b16 %v963, %v955
    %v1396 = vpack.c.b16 %v964, %v956
    %v1397 = vpack.c.b16 %v965, %v957
    %v1398 = vpack.c.b16 %v966, %v958
    %v1399 = vpack.c.b16 %v967, %v959
    %v1400 = vpack.c.b16 %v968, %v960
    %v1401 = vpack.c.b16 %v969, %v961
    %v1402 = vpack.c.b16 %v970, %v962
    %v1403 = vpack.c.b16 %v979, %v971
    %v1404 = vpack.c.b16 %v980, %v972
    %v1405 = vpack.c.b16 %v981, %v973
    %v1406 = vpack.c.b16 %v982, %v974
    %v1407 = vpack.c.b16 %v983, %v975
    %v1408 = vpack.c.b16 %v984, %v976
    %v1409 = vpack.c.b16 %v985, %v977
    %v1410 = vpack.c.b16 %v986, %v978
    %v1411 = vpack.c.b16 %v995, %v987
    %v1412 = vpack.c.b16 %v996, %v988
    %v1413 = vpack.c.b16 %v997, %v989
    %v1414 = vpack.c.b16 %v998, %v990
    %v1415 = vpack.c.b16 %v999, %v991
    %v1416 = vpack.c.b16 %v1000, %v992
    %v1417 = vpack.c.b16 %v1001, %v993
    %v1418 = vpack.c.b16 %v1002, %v994
    %v1419 = vpack.c.b16 %v1011, %v1003
    %v1420 = vpack.c.b16 %v1012, %v1004
    %v1421 = vpack.c.b16 %v1013, %v1005
    %v1422 = vpack.c.b16 %v1014, %v1006
    %v1423 = vpack.c.b16 %v1015, %v1007
    %v1424 = vpack.c.b16 %v1016, %v1008
    %v1425 = vpack.c.b16 %v1017, %v1009
    %v1426 = vpack.c.b16 %v1018, %v1010
    %v1427 = vpack.c.b16 %v1027, %v1019
    %v1428 = vpack.c.b16 %v1028, %v1020
    %v1429 = vpack.c.b16 %v1029, %v1021
    %v1430 = vpack.c.b16 %v1030, %v1022
    %v1431 = vpack.c.b16 %v1031, %v1023
    %v1432 = vpack.c.b16 %v1032, %v1024
    %v1433 = vpack.c.b16 %v1033, %v1025
    %v1434 = vpack.c.b16 %v1034, %v1026
    %v1435 = vpack.c.b16 %v1043, %v1035
    %v1436 = vpack.c.b16 %v1044, %v1036
    %v1437 = vpack.c.b16 %v1045, %v1037
    %v1438 = vpack.c.b16 %v1046, %v1038
    %v1439 = vpack.c.b16 %v1047, %v1039
    %v1440 = vpack.c.b16 %v1048, %v1040
    %v1441 = vpack.c.b16 %v1049, %v1041
    %v1442 = vpack.c.b16 %v1050, %v1042
    %v1443 = vpack.c.b16 %v1059, %v1051
    %v1444 = vpack.c.b16 %v1060, %v1052
    %v1445 = vpack.c.b16 %v1061, %v1053
    %v1446 = vpack.c.b16 %v1062, %v1054
    %v1447 = vpack.c.b16 %v1063, %v1055
    %v1448 = vpack.c.b16 %v1064, %v1056
    %v1449 = vpack.c.b16 %v1065, %v1057
    %v1450 = vpack.c.b16 %v1066, %v1058
    %v1451 = vpack.c.b16 %v1075, %v1067
    %v1452 = vpack.c.b16 %v1076, %v1068
    %v1453 = vpack.c.b16 %v1077, %v1069
    %v1454 = vpack.c.b16 %v1078, %v1070
    %v1455 = vpack.c.b16 %v1079, %v1071
    %v1456 = vpack.c.b16 %v1080, %v1072
    %v1457 = vpack.c.b16 %v1081, %v1073
    %v1458 = vpack.c.b16 %v1082, %v1074
    %v1459 = vpack.c.b16 %v1091, %v1083
    %v1460 = vpack.c.b16 %v1092, %v1084
    %v1461 = vpack.c.b16 %v1093, %v1085
    %v1462 = vpack.c.b16 %v1094, %v1086
    %v1463 = vpack.c.b16 %v1095, %v1087
    %v1464 = vpack.c.b16 %v1096, %v1088
    %v1465 = vpack.c.b16 %v1097, %v1089
    %v1466 = vpack.c.b16 %v1098, %v1090
    %v1467 = vpack.c.b16 %v1107, %v1099
    %v1468 = vpack.c.b16 %v1108, %v1100
    %v1469 = vpack.c.b16 %v1109, %v1101
    %v1470 = vpack.c.b16 %v1110, %v1102
    %v1471 = vpack.c.b16 %v1111, %v1103
    %v1472 = vpack.c.b16 %v1112, %v1104
    %v1473 = vpack.c.b16 %v1113, %v1105
    %v1474 = vpack.c.b16 %v1114, %v1106
    %v1475 = vpack.c.b16 %v1123, %v1115
    %v1476 = vpack.c.b16 %v1124, %v1116
    %v1477 = vpack.c.b16 %v1125, %v1117
    %v1478 = vpack.c.b16 %v1126, %v1118
    %v1479 = vpack.c.b16 %v1127, %v1119
    %v1480 = vpack.c.b16 %v1128, %v1120
    %v1481 = vpack.c.b16 %v1129, %v1121
    %v1482 = vpack.c.b16 %v1130, %v1122
    %v1483 = vpack.c.b16 %v1139, %v1131
    %v1484 = vpack.c.b16 %v1140, %v1132
    %v1485 = vpack.c.b16 %v1141, %v1133
    %v1486 = vpack.c.b16 %v1142, %v1134
    %v1487 = vpack.c.b16 %v1143, %v1135
    %v1488 = vpack.c.b16 %v1144, %v1136
    %v1489 = vpack.c.b16 %v1145, %v1137
    %v1490 = vpack.c.b16 %v1146, %v1138
    %v1491 = vpack.c.b16 %v1155, %v1147
    %v1492 = vpack.c.b16 %v1156, %v1148
    %v1493 = vpack.c.b16 %v1157, %v1149
    %v1494 = vpack.c.b16 %v1158, %v1150
    %v1495 = vpack.c.b16 %v1159, %v1151
    %v1496 = vpack.c.b16 %v1160, %v1152
    %v1497 = vpack.c.b16 %v1161, %v1153
    %v1498 = vpack.c.b16 %v1162, %v1154
    %v1499 = vpack.c.b16 %v1171, %v1163
    %v1500 = vpack.c.b16 %v1172, %v1164
    %v1501 = vpack.c.b16 %v1173, %v1165
    %v1502 = vpack.c.b16 %v1174, %v1166
    %v1503 = vpack.c.b16 %v1175, %v1167
    %v1504 = vpack.c.b16 %v1176, %v1168
    %v1505 = vpack.c.b16 %v1177, %v1169
    %v1506 = vpack.c.b16 %v1178, %v1170
    %v1507 = vpack.c.b16 %v1187, %v1179
    %v1508 = vpack.c.b16 %v1188, %v1180
    %v1509 = vpack.c.b16 %v1189, %v1181
    %v1510 = vpack.c.b16 %v1190, %v1182
    %v1511 = vpack.c.b16 %v1191, %v1183
    %v1512 = vpack.c.b16 %v1192, %v1184
    %v1513 = vpack.c.b16 %v1193, %v1185
    %v1514 = vpack.c.b16 %v1194, %v1186
    %v1515 = vpack.c.b16 %v1203, %v1195
    %v1516 = vpack.c.b16 %v1204, %v1196
    %v1517 = vpack.c.b16 %v1205, %v1197
    %v1518 = vpack.c.b16 %v1206, %v1198
    %v1519 = vpack.c.b16 %v1207, %v1199
    %v1520 = vpack.c.b16 %v1208, %v1200
    %v1521 = vpack.c.b16 %v1209, %v1201
    %v1522 = vpack.c.b16 %v1210, %v1202
    %v1523 = vpack.c.b16 %v1219, %v1211
    %v1524 = vpack.c.b16 %v1220, %v1212
    %v1525 = vpack.c.b16 %v1221, %v1213
    %v1526 = vpack.c.b16 %v1222, %v1214
    %v1527 = vpack.c.b16 %v1223, %v1215
    %v1528 = vpack.c.b16 %v1224, %v1216
    %v1529 = vpack.c.b16 %v1225, %v1217
    %v1530 = vpack.c.b16 %v1226, %v1218
    %v1531 = vpack.c.b16 %v1235, %v1227
    %v1532 = vpack.c.b16 %v1236, %v1228
    %v1533 = vpack.c.b16 %v1237, %v1229
    %v1534 = vpack.c.b16 %v1238, %v1230
    %v1535 = vpack.c.b16 %v1239, %v1231
    %v1536 = vpack.c.b16 %v1240, %v1232
    %v1537 = vpack.c.b16 %v1241, %v1233
    %v1538 = vpack.c.b16 %v1242, %v1234
    %v1539 = vpack.c.b16 %v1251, %v1243
    %v1540 = vpack.c.b16 %v1252, %v1244
    %v1541 = vpack.c.b16 %v1253, %v1245
    %v1542 = vpack.c.b16 %v1254, %v1246
    %v1543 = vpack.c.b16 %v1255, %v1247
    %v1544 = vpack.c.b16 %v1256, %v1248
    %v1545 = vpack.c.b16 %v1257, %v1249
    %v1546 = vpack.c.b16 %v1258, %v1250
    %v1547 = vpack.c.b16 %v1267, %v1259
    %v1548 = vpack.c.b16 %v1268, %v1260
    %v1549 = vpack.c.b16 %v1269, %v1261
    %v1550 = vpack.c.b16 %v1270, %v1262
    %v1551 = vpack.c.b16 %v1271, %v1263
    %v1552 = vpack.c.b16 %v1272, %v1264
    %v1553 = vpack.c.b16 %v1273, %v1265
    %v1554 = vpack.c.b16 %v1274, %v1266
    %v1555 = vpack.c.b16 %v1283, %v1275
    %v1556 = vpack.c.b16 %v1284, %v1276
    %v1557 = vpack.c.b16 %v1285, %v1277
    %v1558 = vpack.c.b16 %v1286, %v1278
    %v1559 = vpack.c.b16 %v1287, %v1279
    %v1560 = vpack.c.b16 %v1288, %v1280
    %v1561 = vpack.c.b16 %v1289, %v1281
    %v1562 = vpack.c.b16 %v1290, %v1282
    %v1563 = vpack.c.b16 %v1299, %v1291
    %v1564 = vpack.c.b16 %v1300, %v1292
    %v1565 = vpack.c.b16 %v1301, %v1293
    %v1566 = vpack.c.b16 %v1302, %v1294
    %v1567 = vpack.c.b16 %v1303, %v1295
    %v1568 = vpack.c.b16 %v1304, %v1296
    %v1569 = vpack.c.b16 %v1305, %v1297
    %v1570 = vpack.c.b16 %v1306, %v1298
    %v1571 = vpack.c.b16 %v1315, %v1307
    %v1572 = vpack.c.b16 %v1316, %v1308
    %v1573 = vpack.c.b16 %v1317, %v1309
    %v1574 = vpack.c.b16 %v1318, %v1310
    %v1575 = vpack.c.b16 %v1319, %v1311
    %v1576 = vpack.c.b16 %v1320, %v1312
    %v1577 = vpack.c.b16 %v1321, %v1313
    %v1578 = vpack.c.b16 %v1322, %v1314
    %1835 = vmatpush.bf16.msra.mxu0 %v1379
    %1836 = vmatpush.bf16.msra.mxu0 %v1371
    %1837 = vmatpush.bf16.msra.mxu0 %v1363
    %1838 = vmatpush.bf16.msra.mxu0 %v1355
    %1839 = vmatpush.bf16.msra.mxu0 %v1347
    %1840 = vmatpush.bf16.msra.mxu0 %v1339
    %1841 = vmatpush.bf16.msra.mxu0 %v1331
    %1842 = vmatpush.bf16.msra.mxu0 %v1323
    %1843 = vmatmul.bf16.gmra.mxu0 %v229
    %v1844 = vpop.f32.mrf.mxu0
    %v1845 = vadd.f32 0.0, %v1844
    %v1846 = vpop.f32.mrf.mxu0
    %1847 = vdwg.mxu0
    %1848 = vmatpush.bf16.msra.mxu0 %v1443
    %1849 = vmatpush.bf16.msra.mxu0 %v1435
    %1850 = vmatpush.bf16.msra.mxu0 %v1427
    %1851 = vmatpush.bf16.msra.mxu0 %v1419
    %1852 = vmatpush.bf16.msra.mxu0 %v1411
    %1853 = vmatpush.bf16.msra.mxu0 %v1403
    %1854 = vmatpush.bf16.msra.mxu0 %v1395
    %1855 = vmatpush.bf16.msra.mxu0 %v1387
    %1856 = vmatmul.bf16.gmra.mxu0 %v230
    %v1857 = vpop.f32.mrf.mxu0
    %v1858 = vadd.f32 %v1845, %v1857
    %v1859 = vpop.f32.mrf.mxu0
    %1860 = vdwg.mxu0
    %1861 = vmatpush.bf16.msra.mxu0 %v1507
    %1862 = vmatpush.bf16.msra.mxu0 %v1499
    %1863 = vmatpush.bf16.msra.mxu0 %v1491
    %1864 = vmatpush.bf16.msra.mxu0 %v1483
    %1865 = vmatpush.bf16.msra.mxu0 %v1475
    %1866 = vmatpush.bf16.msra.mxu0 %v1467
    %1867 = vmatpush.bf16.msra.mxu0 %v1459
    %1868 = vmatpush.bf16.msra.mxu0 %v1451
    %1869 = vmatmul.bf16.gmra.mxu0 %v231
    %v1870 = vpop.f32.mrf.mxu0
    %v1871 = vadd.f32 %v1858, %v1870
    %v1872 = vpop.f32.mrf.mxu0
    %1873 = vdwg.mxu0
    %1874 = vmatpush.bf16.msra.mxu0 %v1571
    %1875 = vmatpush.bf16.msra.mxu0 %v1563
    %1876 = vmatpush.bf16.msra.mxu0 %v1555
    %1877 = vmatpush.bf16.msra.mxu0 %v1547
    %1878 = vmatpush.bf16.msra.mxu0 %v1539
    %1879 = vmatpush.bf16.msra.mxu0 %v1531
    %1880 = vmatpush.bf16.msra.mxu0 %v1523
    %1881 = vmatpush.bf16.msra.mxu0 %v1515
    %1882 = vmatmul.bf16.gmra.mxu0 %v232
    %v1883 = vpop.f32.mrf.mxu0
    %v1884 = vadd.f32 %v1871, %v1883
    %v1885 = vpop.f32.mrf.mxu0
    %1886 = vdwg.mxu0
    %1887 = vmatpush.bf16.msra.mxu0 %v1380
    %1888 = vmatpush.bf16.msra.mxu0 %v1372
    %1889 = vmatpush.bf16.msra.mxu0 %v1364
    %1890 = vmatpush.bf16.msra.mxu0 %v1356
    %1891 = vmatpush.bf16.msra.mxu0 %v1348
    %1892 = vmatpush.bf16.msra.mxu0 %v1340
    %1893 = vmatpush.bf16.msra.mxu0 %v1332
    %1894 = vmatpush.bf16.msra.mxu0 %v1324
    %1895 = vmatmul.bf16.gmra.mxu0 %v229
    %v1896 = vpop.f32.mrf.mxu0
    %v1897 = vadd.f32 0.0, %v1896
    %v1898 = vpop.f32.mrf.mxu0
    %1899 = vdwg.mxu0
    %1900 = vmatpush.bf16.msra.mxu0 %v1444
    %1901 = vmatpush.bf16.msra.mxu0 %v1436
    %1902 = vmatpush.bf16.msra.mxu0 %v1428
    %1903 = vmatpush.bf16.msra.mxu0 %v1420
    %1904 = vmatpush.bf16.msra.mxu0 %v1412
    %1905 = vmatpush.bf16.msra.mxu0 %v1404
    %1906 = vmatpush.bf16.msra.mxu0 %v1396
    %1907 = vmatpush.bf16.msra.mxu0 %v1388
    %1908 = vmatmul.bf16.gmra.mxu0 %v230
    %v1909 = vpop.f32.mrf.mxu0
    %v1910 = vadd.f32 %v1897, %v1909
    %v1911 = vpop.f32.mrf.mxu0
    %1912 = vdwg.mxu0
    %1913 = vmatpush.bf16.msra.mxu0 %v1508
    %1914 = vmatpush.bf16.msra.mxu0 %v1500
    %1915 = vmatpush.bf16.msra.mxu0 %v1492
    %1916 = vmatpush.bf16.msra.mxu0 %v1484
    %1917 = vmatpush.bf16.msra.mxu0 %v1476
    %1918 = vmatpush.bf16.msra.mxu0 %v1468
    %1919 = vmatpush.bf16.msra.mxu0 %v1460
    %1920 = vmatpush.bf16.msra.mxu0 %v1452
    %1921 = vmatmul.bf16.gmra.mxu0 %v231
    %v1922 = vpop.f32.mrf.mxu0
    %v1923 = vadd.f32 %v1910, %v1922
    %v1924 = vpop.f32.mrf.mxu0
    %1925 = vdwg.mxu0
    %1926 = vmatpush.bf16.msra.mxu0 %v1572
    %1927 = vmatpush.bf16.msra.mxu0 %v1564
    %1928 = vmatpush.bf16.msra.mxu0 %v1556
    %1929 = vmatpush.bf16.msra.mxu0 %v1548
    %1930 = vmatpush.bf16.msra.mxu0 %v1540
    %1931 = vmatpush.bf16.msra.mxu0 %v1532
    %1932 = vmatpush.bf16.msra.mxu0 %v1524
    %1933 = vmatpush.bf16.msra.mxu0 %v1516
    %1934 = vmatmul.bf16.gmra.mxu0 %v232
    %v1935 = vpop.f32.mrf.mxu0
    %v1936 = vadd.f32 %v1923, %v1935
    %v1937 = vpop.f32.mrf.mxu0
    %1938 = vdwg.mxu0
    %1939 = vmatpush.bf16.msra.mxu0 %v1381
    %1940 = vmatpush.bf16.msra.mxu0 %v1373
    %1941 = vmatpush.bf16.msra.mxu0 %v1365
    %1942 = vmatpush.bf16.msra.mxu0 %v1357
    %1943 = vmatpush.bf16.msra.mxu0 %v1349
    %1944 = vmatpush.bf16.msra.mxu0 %v1341
    %1945 = vmatpush.bf16.msra.mxu0 %v1333
    %1946 = vmatpush.bf16.msra.mxu0 %v1325
    %1947 = vmatmul.bf16.gmra.mxu0 %v229
    %v1948 = vpop.f32.mrf.mxu0
    %v1949 = vadd.f32 0.0, %v1948
    %v1950 = vpop.f32.mrf.mxu0
    %1951 = vdwg.mxu0
    %1952 = vmatpush.bf16.msra.mxu0 %v1445
    %1953 = vmatpush.bf16.msra.mxu0 %v1437
    %1954 = vmatpush.bf16.msra.mxu0 %v1429
    %1955 = vmatpush.bf16.msra.mxu0 %v1421
    %1956 = vmatpush.bf16.msra.mxu0 %v1413
    %1957 = vmatpush.bf16.msra.mxu0 %v1405
    %1958 = vmatpush.bf16.msra.mxu0 %v1397
    %1959 = vmatpush.bf16.msra.mxu0 %v1389
    %1960 = vmatmul.bf16.gmra.mxu0 %v230
    %v1961 = vpop.f32.mrf.mxu0
    %v1962 = vadd.f32 %v1949, %v1961
    %v1963 = vpop.f32.mrf.mxu0
    %1964 = vdwg.mxu0
    %1965 = vmatpush.bf16.msra.mxu0 %v1509
    %1966 = vmatpush.bf16.msra.mxu0 %v1501
    %1967 = vmatpush.bf16.msra.mxu0 %v1493
    %1968 = vmatpush.bf16.msra.mxu0 %v1485
    %1969 = vmatpush.bf16.msra.mxu0 %v1477
    %1970 = vmatpush.bf16.msra.mxu0 %v1469
    %1971 = vmatpush.bf16.msra.mxu0 %v1461
    %1972 = vmatpush.bf16.msra.mxu0 %v1453
    %1973 = vmatmul.bf16.gmra.mxu0 %v231
    %v1974 = vpop.f32.mrf.mxu0
    %v1975 = vadd.f32 %v1962, %v1974
    %v1976 = vpop.f32.mrf.mxu0
    %1977 = vdwg.mxu0
    %1978 = vmatpush.bf16.msra.mxu0 %v1573
    %1979 = vmatpush.bf16.msra.mxu0 %v1565
    %1980 = vmatpush.bf16.msra.mxu0 %v1557
    %1981 = vmatpush.bf16.msra.mxu0 %v1549
    %1982 = vmatpush.bf16.msra.mxu0 %v1541
    %1983 = vmatpush.bf16.msra.mxu0 %v1533
    %1984 = vmatpush.bf16.msra.mxu0 %v1525
    %1985 = vmatpush.bf16.msra.mxu0 %v1517
    %1986 = vmatmul.bf16.gmra.mxu0 %v232
    %v1987 = vpop.f32.mrf.mxu0
    %v1988 = vadd.f32 %v1975, %v1987
    %v1989 = vpop.f32.mrf.mxu0
    %1990 = vdwg.mxu0
    %1991 = vmatpush.bf16.msra.mxu0 %v1382
    %1992 = vmatpush.bf16.msra.mxu0 %v1374
    %1993 = vmatpush.bf16.msra.mxu0 %v1366
    %1994 = vmatpush.bf16.msra.mxu0 %v1358
    %1995 = vmatpush.bf16.msra.mxu0 %v1350
    %1996 = vmatpush.bf16.msra.mxu0 %v1342
    %1997 = vmatpush.bf16.msra.mxu0 %v1334
    %1998 = vmatpush.bf16.msra.mxu0 %v1326
    %1999 = vmatmul.bf16.gmra.mxu0 %v229
    %v2000 = vpop.f32.mrf.mxu0
    %v2001 = vadd.f32 0.0, %v2000
    %v2002 = vpop.f32.mrf.mxu0
    %2003 = vdwg.mxu0
    %2004 = vmatpush.bf16.msra.mxu0 %v1446
    %2005 = vmatpush.bf16.msra.mxu0 %v1438
    %2006 = vmatpush.bf16.msra.mxu0 %v1430
    %2007 = vmatpush.bf16.msra.mxu0 %v1422
    %2008 = vmatpush.bf16.msra.mxu0 %v1414
    %2009 = vmatpush.bf16.msra.mxu0 %v1406
    %2010 = vmatpush.bf16.msra.mxu0 %v1398
    %2011 = vmatpush.bf16.msra.mxu0 %v1390
    %2012 = vmatmul.bf16.gmra.mxu0 %v230
    %v2013 = vpop.f32.mrf.mxu0
    %v2014 = vadd.f32 %v2001, %v2013
    %v2015 = vpop.f32.mrf.mxu0
    %2016 = vdwg.mxu0
    %2017 = vmatpush.bf16.msra.mxu0 %v1510
    %2018 = vmatpush.bf16.msra.mxu0 %v1502
    %2019 = vmatpush.bf16.msra.mxu0 %v1494
    %2020 = vmatpush.bf16.msra.mxu0 %v1486
    %2021 = vmatpush.bf16.msra.mxu0 %v1478
    %2022 = vmatpush.bf16.msra.mxu0 %v1470
    %2023 = vmatpush.bf16.msra.mxu0 %v1462
    %2024 = vmatpush.bf16.msra.mxu0 %v1454
    %2025 = vmatmul.bf16.gmra.mxu0 %v231
    %v2026 = vpop.f32.mrf.mxu0
    %v2027 = vadd.f32 %v2014, %v2026
    %v2028 = vpop.f32.mrf.mxu0
    %2029 = vdwg.mxu0
    %2030 = vmatpush.bf16.msra.mxu0 %v1574
    %2031 = vmatpush.bf16.msra.mxu0 %v1566
    %2032 = vmatpush.bf16.msra.mxu0 %v1558
    %2033 = vmatpush.bf16.msra.mxu0 %v1550
    %2034 = vmatpush.bf16.msra.mxu0 %v1542
    %2035 = vmatpush.bf16.msra.mxu0 %v1534
    %2036 = vmatpush.bf16.msra.mxu0 %v1526
    %2037 = vmatpush.bf16.msra.mxu0 %v1518
    %2038 = vmatmul.bf16.gmra.mxu0 %v232
    %v2039 = vpop.f32.mrf.mxu0
    %v2040 = vadd.f32 %v2027, %v2039
    %v2041 = vpop.f32.mrf.mxu0
    %2042 = vdwg.mxu0
    %2043 = vmatpush.bf16.msra.mxu0 %v1383
    %2044 = vmatpush.bf16.msra.mxu0 %v1375
    %2045 = vmatpush.bf16.msra.mxu0 %v1367
    %2046 = vmatpush.bf16.msra.mxu0 %v1359
    %2047 = vmatpush.bf16.msra.mxu0 %v1351
    %2048 = vmatpush.bf16.msra.mxu0 %v1343
    %2049 = vmatpush.bf16.msra.mxu0 %v1335
    %2050 = vmatpush.bf16.msra.mxu0 %v1327
    %2051 = vmatmul.bf16.gmra.mxu0 %v229
    %v2052 = vpop.f32.mrf.mxu0
    %v2053 = vadd.f32 0.0, %v2052
    %v2054 = vpop.f32.mrf.mxu0
    %2055 = vdwg.mxu0
    %2056 = vmatpush.bf16.msra.mxu0 %v1447
    %2057 = vmatpush.bf16.msra.mxu0 %v1439
    %2058 = vmatpush.bf16.msra.mxu0 %v1431
    %2059 = vmatpush.bf16.msra.mxu0 %v1423
    %2060 = vmatpush.bf16.msra.mxu0 %v1415
    %2061 = vmatpush.bf16.msra.mxu0 %v1407
    %2062 = vmatpush.bf16.msra.mxu0 %v1399
    %2063 = vmatpush.bf16.msra.mxu0 %v1391
    %2064 = vmatmul.bf16.gmra.mxu0 %v230
    %v2065 = vpop.f32.mrf.mxu0
    %v2066 = vadd.f32 %v2053, %v2065
    %v2067 = vpop.f32.mrf.mxu0
    %2068 = vdwg.mxu0
    %2069 = vmatpush.bf16.msra.mxu0 %v1511
    %2070 = vmatpush.bf16.msra.mxu0 %v1503
    %2071 = vmatpush.bf16.msra.mxu0 %v1495
    %2072 = vmatpush.bf16.msra.mxu0 %v1487
    %2073 = vmatpush.bf16.msra.mxu0 %v1479
    %2074 = vmatpush.bf16.msra.mxu0 %v1471
    %2075 = vmatpush.bf16.msra.mxu0 %v1463
    %2076 = vmatpush.bf16.msra.mxu0 %v1455
    %2077 = vmatmul.bf16.gmra.mxu0 %v231
    %v2078 = vpop.f32.mrf.mxu0
    %v2079 = vadd.f32 %v2066, %v2078
    %v2080 = vpop.f32.mrf.mxu0
    %2081 = vdwg.mxu0
    %2082 = vmatpush.bf16.msra.mxu0 %v1575
    %2083 = vmatpush.bf16.msra.mxu0 %v1567
    %2084 = vmatpush.bf16.msra.mxu0 %v1559
    %2085 = vmatpush.bf16.msra.mxu0 %v1551
    %2086 = vmatpush.bf16.msra.mxu0 %v1543
    %2087 = vmatpush.bf16.msra.mxu0 %v1535
    %2088 = vmatpush.bf16.msra.mxu0 %v1527
    %2089 = vmatpush.bf16.msra.mxu0 %v1519
    %2090 = vmatmul.bf16.gmra.mxu0 %v232
    %v2091 = vpop.f32.mrf.mxu0
    %v2092 = vadd.f32 %v2079, %v2091
    %v2093 = vpop.f32.mrf.mxu0
    %2094 = vdwg.mxu0
    %2095 = vmatpush.bf16.msra.mxu0 %v1384
    %2096 = vmatpush.bf16.msra.mxu0 %v1376
    %2097 = vmatpush.bf16.msra.mxu0 %v1368
    %2098 = vmatpush.bf16.msra.mxu0 %v1360
    %2099 = vmatpush.bf16.msra.mxu0 %v1352
    %2100 = vmatpush.bf16.msra.mxu0 %v1344
    %2101 = vmatpush.bf16.msra.mxu0 %v1336
    %2102 = vmatpush.bf16.msra.mxu0 %v1328
    %2103 = vmatmul.bf16.gmra.mxu0 %v229
    %v2104 = vpop.f32.mrf.mxu0
    %v2105 = vadd.f32 0.0, %v2104
    %v2106 = vpop.f32.mrf.mxu0
    %2107 = vdwg.mxu0
    %2108 = vmatpush.bf16.msra.mxu0 %v1448
    %2109 = vmatpush.bf16.msra.mxu0 %v1440
    %2110 = vmatpush.bf16.msra.mxu0 %v1432
    %2111 = vmatpush.bf16.msra.mxu0 %v1424
    %2112 = vmatpush.bf16.msra.mxu0 %v1416
    %2113 = vmatpush.bf16.msra.mxu0 %v1408
    %2114 = vmatpush.bf16.msra.mxu0 %v1400
    %2115 = vmatpush.bf16.msra.mxu0 %v1392
    %2116 = vmatmul.bf16.gmra.mxu0 %v230
    %v2117 = vpop.f32.mrf.mxu0
    %v2118 = vadd.f32 %v2105, %v2117
    %v2119 = vpop.f32.mrf.mxu0
    %2120 = vdwg.mxu0
    %2121 = vmatpush.bf16.msra.mxu0 %v1512
    %2122 = vmatpush.bf16.msra.mxu0 %v1504
    %2123 = vmatpush.bf16.msra.mxu0 %v1496
    %2124 = vmatpush.bf16.msra.mxu0 %v1488
    %2125 = vmatpush.bf16.msra.mxu0 %v1480
    %2126 = vmatpush.bf16.msra.mxu0 %v1472
    %2127 = vmatpush.bf16.msra.mxu0 %v1464
    %2128 = vmatpush.bf16.msra.mxu0 %v1456
    %2129 = vmatmul.bf16.gmra.mxu0 %v231
    %v2130 = vpop.f32.mrf.mxu0
    %v2131 = vadd.f32 %v2118, %v2130
    %v2132 = vpop.f32.mrf.mxu0
    %2133 = vdwg.mxu0
    %2134 = vmatpush.bf16.msra.mxu0 %v1576
    %2135 = vmatpush.bf16.msra.mxu0 %v1568
    %2136 = vmatpush.bf16.msra.mxu0 %v1560
    %2137 = vmatpush.bf16.msra.mxu0 %v1552
    %2138 = vmatpush.bf16.msra.mxu0 %v1544
    %2139 = vmatpush.bf16.msra.mxu0 %v1536
    %2140 = vmatpush.bf16.msra.mxu0 %v1528
    %2141 = vmatpush.bf16.msra.mxu0 %v1520
    %2142 = vmatmul.bf16.gmra.mxu0 %v232
    %v2143 = vpop.f32.mrf.mxu0
    %v2144 = vadd.f32 %v2131, %v2143
    %v2145 = vpop.f32.mrf.mxu0
    %2146 = vdwg.mxu0
    %2147 = vmatpush.bf16.msra.mxu0 %v1385
    %2148 = vmatpush.bf16.msra.mxu0 %v1377
    %2149 = vmatpush.bf16.msra.mxu0 %v1369
    %2150 = vmatpush.bf16.msra.mxu0 %v1361
    %2151 = vmatpush.bf16.msra.mxu0 %v1353
    %2152 = vmatpush.bf16.msra.mxu0 %v1345
    %2153 = vmatpush.bf16.msra.mxu0 %v1337
    %2154 = vmatpush.bf16.msra.mxu0 %v1329
    %2155 = vmatmul.bf16.gmra.mxu0 %v229
    %v2156 = vpop.f32.mrf.mxu0
    %v2157 = vadd.f32 0.0, %v2156
    %v2158 = vpop.f32.mrf.mxu0
    %2159 = vdwg.mxu0
    %2160 = vmatpush.bf16.msra.mxu0 %v1449
    %2161 = vmatpush.bf16.msra.mxu0 %v1441
    %2162 = vmatpush.bf16.msra.mxu0 %v1433
    %2163 = vmatpush.bf16.msra.mxu0 %v1425
    %2164 = vmatpush.bf16.msra.mxu0 %v1417
    %2165 = vmatpush.bf16.msra.mxu0 %v1409
    %2166 = vmatpush.bf16.msra.mxu0 %v1401
    %2167 = vmatpush.bf16.msra.mxu0 %v1393
    %2168 = vmatmul.bf16.gmra.mxu0 %v230
    %v2169 = vpop.f32.mrf.mxu0
    %v2170 = vadd.f32 %v2157, %v2169
    %v2171 = vpop.f32.mrf.mxu0
    %2172 = vdwg.mxu0
    %2173 = vmatpush.bf16.msra.mxu0 %v1513
    %2174 = vmatpush.bf16.msra.mxu0 %v1505
    %2175 = vmatpush.bf16.msra.mxu0 %v1497
    %2176 = vmatpush.bf16.msra.mxu0 %v1489
    %2177 = vmatpush.bf16.msra.mxu0 %v1481
    %2178 = vmatpush.bf16.msra.mxu0 %v1473
    %2179 = vmatpush.bf16.msra.mxu0 %v1465
    %2180 = vmatpush.bf16.msra.mxu0 %v1457
    %2181 = vmatmul.bf16.gmra.mxu0 %v231
    %v2182 = vpop.f32.mrf.mxu0
    %v2183 = vadd.f32 %v2170, %v2182
    %v2184 = vpop.f32.mrf.mxu0
    %2185 = vdwg.mxu0
    %2186 = vmatpush.bf16.msra.mxu0 %v1577
    %2187 = vmatpush.bf16.msra.mxu0 %v1569
    %2188 = vmatpush.bf16.msra.mxu0 %v1561
    %2189 = vmatpush.bf16.msra.mxu0 %v1553
    %2190 = vmatpush.bf16.msra.mxu0 %v1545
    %2191 = vmatpush.bf16.msra.mxu0 %v1537
    %2192 = vmatpush.bf16.msra.mxu0 %v1529
    %2193 = vmatpush.bf16.msra.mxu0 %v1521
    %2194 = vmatmul.bf16.gmra.mxu0 %v232
    %v2195 = vpop.f32.mrf.mxu0
    %v2196 = vadd.f32 %v2183, %v2195
    %v2197 = vpop.f32.mrf.mxu0
    %2198 = vdwg.mxu0
    %2199 = vmatpush.bf16.msra.mxu0 %v1386
    %2200 = vmatpush.bf16.msra.mxu0 %v1378
    %2201 = vmatpush.bf16.msra.mxu0 %v1370
    %2202 = vmatpush.bf16.msra.mxu0 %v1362
    %2203 = vmatpush.bf16.msra.mxu0 %v1354
    %2204 = vmatpush.bf16.msra.mxu0 %v1346
    %2205 = vmatpush.bf16.msra.mxu0 %v1338
    %2206 = vmatpush.bf16.msra.mxu0 %v1330
    %2207 = vmatmul.bf16.gmra.mxu0 %v229
    %v2208 = vpop.f32.mrf.mxu0
    %v2209 = vadd.f32 0.0, %v2208
    %v2210 = vpop.f32.mrf.mxu0
    %2211 = vdwg.mxu0
    %2212 = vmatpush.bf16.msra.mxu0 %v1450
    %2213 = vmatpush.bf16.msra.mxu0 %v1442
    %2214 = vmatpush.bf16.msra.mxu0 %v1434
    %2215 = vmatpush.bf16.msra.mxu0 %v1426
    %2216 = vmatpush.bf16.msra.mxu0 %v1418
    %2217 = vmatpush.bf16.msra.mxu0 %v1410
    %2218 = vmatpush.bf16.msra.mxu0 %v1402
    %2219 = vmatpush.bf16.msra.mxu0 %v1394
    %2220 = vmatmul.bf16.gmra.mxu0 %v230
    %v2221 = vpop.f32.mrf.mxu0
    %v2222 = vadd.f32 %v2209, %v2221
    %v2223 = vpop.f32.mrf.mxu0
    %2224 = vdwg.mxu0
    %2225 = vmatpush.bf16.msra.mxu0 %v1514
    %2226 = vmatpush.bf16.msra.mxu0 %v1506
    %2227 = vmatpush.bf16.msra.mxu0 %v1498
    %2228 = vmatpush.bf16.msra.mxu0 %v1490
    %2229 = vmatpush.bf16.msra.mxu0 %v1482
    %2230 = vmatpush.bf16.msra.mxu0 %v1474
    %2231 = vmatpush.bf16.msra.mxu0 %v1466
    %2232 = vmatpush.bf16.msra.mxu0 %v1458
    %2233 = vmatmul.bf16.gmra.mxu0 %v231
    %v2234 = vpop.f32.mrf.mxu0
    %v2235 = vadd.f32 %v2222, %v2234
    %v2236 = vpop.f32.mrf.mxu0
    %2237 = vdwg.mxu0
    %2238 = vmatpush.bf16.msra.mxu0 %v1578
    %2239 = vmatpush.bf16.msra.mxu0 %v1570
    %2240 = vmatpush.bf16.msra.mxu0 %v1562
    %2241 = vmatpush.bf16.msra.mxu0 %v1554
    %2242 = vmatpush.bf16.msra.mxu0 %v1546
    %2243 = vmatpush.bf16.msra.mxu0 %v1538
    %2244 = vmatpush.bf16.msra.mxu0 %v1530
    %2245 = vmatpush.bf16.msra.mxu0 %v1522
    %2246 = vmatmul.bf16.gmra.mxu0 %v232
    %v2247 = vpop.f32.mrf.mxu0
    %v2248 = vadd.f32 %v2235, %v2247
    %v2249 = vpop.f32.mrf.mxu0
    %2250 = vdwg.mxu0
    %2251 = vst [vmem:[#allocation8] sm:$0xff] %v1884
    %2252 = vst [vmem:[#allocation8 + $0x8] sm:$0xff] %v1936
    %2253 = vst [vmem:[#allocation8 + $0x10] sm:$0xff] %v1988
    %2254 = vst [vmem:[#allocation8 + $0x18] sm:$0xff] %v2040
    %2255 = vst [vmem:[#allocation8 + $0x20] sm:$0xff] %v2092
    %2256 = vst [vmem:[#allocation8 + $0x28] sm:$0xff] %v2144
    %2257 = vst [vmem:[#allocation8 + $0x30] sm:$0xff] %v2196
    %2258 = vst [vmem:[#allocation8 + $0x38] sm:$0xff] %v2248
    %v2259 = vlaneseq
    %v2260 = vand.u32 %v2259, 127
    %v2261 = vcvt.s32.f32 %v2260
    %v2262 = vlaneseq
    %v2263 = vshrl.u32 %v2262, 7
    %v2264 = vcvt.s32.f32 %v2263
    %v2265 = vsel %vm297, %v294, -inf
    %2266 = vmax.xlane.f32.xlu0 %v2265
    %v2267 = vpop.xlane.xlu0 %2266
    %vm2268 = vcmp.ge.f32.partialorder %v294, %v2267
    %v2269 = vsel %vm2268, %v2261, 16.0
    %v2270 = vsel %vm297, %v2269, inf
    %2271 = vmin.xlane.f32.xlu0 %v2270
    %v2272 = vpop.xlane.xlu0 %2271
    %vm2273 = vcmp.eq.f32.partialorder %v2261, %v2272
    %v2274 = vsel %vm2273, 1, 0
    %v2275 = vcvt.s32.f32 %v2274
    %v2276 = vpack.c.bf16 %v2275, %v2275
    %v2278 = vsel %vm297, %v2276, 0
    %2280 = vmatpush.bf16.msra.mxu0 0
    %2281 = vmatpush.bf16.msra.mxu0 0
    %2282 = vmatpush.bf16.msra.mxu0 0
    %2283 = vmatpush.bf16.msra.mxu0 0
    %2284 = vmatpush.bf16.msra.mxu0 0
    %2285 = vmatpush.bf16.msra.mxu0 0
    %2286 = vmatpush.bf16.msra.mxu0 0
    %2287 = vmatpush.bf16.msra.mxu0 %v241
    %2288 = vmatmul.bf16.gmra.mxu0 %v2278
    %v2289 = vpop.f32.mrf.mxu0
    %v2290 = vadd.f32 0.0, %v2289
    %v2291 = vpop.f32.mrf.mxu0
    %2292 = vdwg.mxu0
    %2293 = vmatpush.bf16.msra.mxu0 0
    %2294 = vmatpush.bf16.msra.mxu0 0
    %2295 = vmatpush.bf16.msra.mxu0 0
    %2296 = vmatpush.bf16.msra.mxu0 0
    %2297 = vmatpush.bf16.msra.mxu0 0
    %2298 = vmatpush.bf16.msra.mxu0 0
    %2299 = vmatpush.bf16.msra.mxu0 0
    %2300 = vmatpush.bf16.msra.mxu0 %v242
    %2301 = vmatmul.bf16.gmra.mxu0 %v2278
    %v2302 = vpop.f32.mrf.mxu0
    %v2303 = vadd.f32 0.0, %v2302
    %v2304 = vpop.f32.mrf.mxu0
    %2305 = vdwg.mxu0
    %2306 = vmatpush.bf16.msra.mxu0 0
    %2307 = vmatpush.bf16.msra.mxu0 0
    %2308 = vmatpush.bf16.msra.mxu0 0
    %2309 = vmatpush.bf16.msra.mxu0 0
    %2310 = vmatpush.bf16.msra.mxu0 0
    %2311 = vmatpush.bf16.msra.mxu0 0
    %2312 = vmatpush.bf16.msra.mxu0 0
    %2313 = vmatpush.bf16.msra.mxu0 %v243
    %2314 = vmatmul.bf16.gmra.mxu0 %v2278
    %v2315 = vpop.f32.mrf.mxu0
    %v2316 = vadd.f32 0.0, %v2315
    %v2317 = vpop.f32.mrf.mxu0
    %2318 = vdwg.mxu0
    %2319 = vmatpush.bf16.msra.mxu0 0
    %2320 = vmatpush.bf16.msra.mxu0 0
    %2321 = vmatpush.bf16.msra.mxu0 0
    %2322 = vmatpush.bf16.msra.mxu0 0
    %2323 = vmatpush.bf16.msra.mxu0 0
    %2324 = vmatpush.bf16.msra.mxu0 0
    %2325 = vmatpush.bf16.msra.mxu0 0
    %2326 = vmatpush.bf16.msra.mxu0 %v244
    %2327 = vmatmul.bf16.gmra.mxu0 %v2278
    %v2328 = vpop.f32.mrf.mxu0
    %v2329 = vadd.f32 0.0, %v2328
    %v2330 = vpop.f32.mrf.mxu0
    %2331 = vdwg.mxu0
    %v2332 = vadd.f32 %v2290, %v221
    %v2333 = vadd.f32 %v2303, %v222
    %v2334 = vadd.f32 %v2316, %v223
    %v2335 = vadd.f32 %v2329, %v224
    %vm2336 = vcmp.gt.f32.partialorder %v2332, 0.0
    %vm2337 = vcmp.gt.f32.partialorder %v2333, 0.0
    %vm2338 = vcmp.gt.f32.partialorder %v2334, 0.0
    %vm2339 = vcmp.gt.f32.partialorder %v2335, 0.0
    %v2340 = vsel %vm2336, 1.0, -1.0
    %v2341 = vsel %vm2337, 1.0, -1.0
    %v2342 = vsel %vm2338, 1.0, -1.0
    %v2343 = vsel %vm2339, 1.0, -1.0
    %vm2344 = vcmp.gt.f32.partialorder %v2275, 0.0
    %v2345 = vadd.f32 %v2264, 1.0
    %v2346 = vsel %vm2344, %v2345, 0.0
    %v2347 = vsel %vm297, %v2346, -inf
    %v2348 = vrot.slane %v2347, 4
    %v2349 = vmax.f32 %v2347, %v2348
    %v2350 = vrot.slane %v2349, 2
    %v2351 = vmax.f32 %v2349, %v2350
    %v2352 = vrot.slane %v2351, 1
    %v2353 = vmax.f32 %v2351, %v2352
    %vm2354 = vcmp.ge.f32.partialorder %v2346, %v2353
    %vm2355 = vmand %vm2344, %vm2354
    %v2356 = vsub.f32 %v2340, %v2290
    %v2357 = vsub.f32 %v2341, %v2303
    %v2358 = vsub.f32 %v2342, %v2316
    %v2359 = vsub.f32 %v2343, %v2329
    %v2360 = vpack.c.bf16 %v2356, %v2356
    %v2361 = vpack.c.bf16 %v2357, %v2357
    %v2362 = vpack.c.bf16 %v2358, %v2358
    %v2363 = vpack.c.bf16 %v2359, %v2359
    %v2364 = vsel %vm2355, 1, 0
    %v2365 = vcvt.s32.f32 %v2364
    %v2366 = vpack.c.bf16 %v2365, %v2365
    %2367 = vxpose.xlu0.c.b16.start [1/8] %v2366, 128
    %2368 = vxpose.xlu0.c.b16.cont [2/8] 0, 128
    %2369 = vxpose.xlu0.c.b16.cont [3/8] 0, 128
    %2370 = vxpose.xlu0.c.b16.cont [4/8] 0, 128
    %2371 = vxpose.xlu0.c.b16.cont [5/8] 0, 128
    %2372 = vxpose.xlu0.c.b16.cont [6/8] 0, 128
    %2373 = vxpose.xlu0.c.b16.cont [7/8] 0, 128
    %2374 = vxpose.xlu0.c.b16.end [8/8] 0, 128
    %v2375 = vpop.trf.xlu0
    %v2376 = vpop.trf.xlu0
    %v2377 = vpop.trf.xlu0
    %v2378 = vpop.trf.xlu0
    %v2379 = vpop.trf.xlu0
    %v2380 = vpop.trf.xlu0
    %v2381 = vpop.trf.xlu0
    %v2382 = vpop.trf.xlu0
    %vm2383 = vcmask 64512
    %v2385 = vsel %vm2383, %v2375, 0
    %vm2387 = vcmask 1043456
    %v2389 = vsel %vm2387, %v2360, 0
    %v2392 = vsel %vm2387, %v2361, 0
    %v2395 = vsel %vm2387, %v2362, 0
    %v2398 = vsel %vm2387, %v2363, 0
    %2400 = vmatpush.bf16.msra.mxu0 0
    %2401 = vmatpush.bf16.msra.mxu0 0
    %2402 = vmatpush.bf16.msra.mxu0 0
    %2403 = vmatpush.bf16.msra.mxu0 0
    %2404 = vmatpush.bf16.msra.mxu0 0
    %2405 = vmatpush.bf16.msra.mxu0 0
    %2406 = vmatpush.bf16.msra.mxu0 0
    %2407 = vmatpush.bf16.msra.mxu0 %v2389
    %2408 = vmatmul.bf16.gmra.mxu0 %v2385
    %v2409 = vpop.f32.mrf.mxu0
    %v2410 = vadd.f32 0.0, %v2409
    %v2411 = vpop.f32.mrf.mxu0
    %v2412 = vadd.f32 0.0, %v2411
    %2413 = vdwg.mxu0
    %2414 = vmatpush.bf16.msra.mxu0 0
    %2415 = vmatpush.bf16.msra.mxu0 0
    %2416 = vmatpush.bf16.msra.mxu0 0
    %2417 = vmatpush.bf16.msra.mxu0 0
    %2418 = vmatpush.bf16.msra.mxu0 0
    %2419 = vmatpush.bf16.msra.mxu0 0
    %2420 = vmatpush.bf16.msra.mxu0 0
    %2421 = vmatpush.bf16.msra.mxu0 %v2392
    %2422 = vmatmul.bf16.gmra.mxu0 %v2385
    %v2423 = vpop.f32.mrf.mxu0
    %v2424 = vadd.f32 0.0, %v2423
    %v2425 = vpop.f32.mrf.mxu0
    %v2426 = vadd.f32 0.0, %v2425
    %2427 = vdwg.mxu0
    %2428 = vmatpush.bf16.msra.mxu0 0
    %2429 = vmatpush.bf16.msra.mxu0 0
    %2430 = vmatpush.bf16.msra.mxu0 0
    %2431 = vmatpush.bf16.msra.mxu0 0
    %2432 = vmatpush.bf16.msra.mxu0 0
    %2433 = vmatpush.bf16.msra.mxu0 0
    %2434 = vmatpush.bf16.msra.mxu0 0
    %2435 = vmatpush.bf16.msra.mxu0 %v2395
    %2436 = vmatmul.bf16.gmra.mxu0 %v2385
    %v2437 = vpop.f32.mrf.mxu0
    %v2438 = vadd.f32 0.0, %v2437
    %v2439 = vpop.f32.mrf.mxu0
    %v2440 = vadd.f32 0.0, %v2439
    %2441 = vdwg.mxu0
    %2442 = vmatpush.bf16.msra.mxu0 0
    %2443 = vmatpush.bf16.msra.mxu0 0
    %2444 = vmatpush.bf16.msra.mxu0 0
    %2445 = vmatpush.bf16.msra.mxu0 0
    %2446 = vmatpush.bf16.msra.mxu0 0
    %2447 = vmatpush.bf16.msra.mxu0 0
    %2448 = vmatpush.bf16.msra.mxu0 0
    %2449 = vmatpush.bf16.msra.mxu0 %v2398
    %2450 = vmatmul.bf16.gmra.mxu0 %v2385
    %v2451 = vpop.f32.mrf.mxu0
    %v2452 = vadd.f32 0.0, %v2451
    %v2453 = vpop.f32.mrf.mxu0
    %v2454 = vadd.f32 0.0, %v2453
    %2455 = vdwg.mxu0
    %v2456 = vadd.f32 %v233, %v2410
    %v2457 = vadd.f32 %v234, %v2424
    %v2458 = vadd.f32 %v235, %v2438
    %v2459 = vadd.f32 %v236, %v2452
    %v2460 = vadd.f32 %v237, %v2412
    %v2461 = vadd.f32 %v238, %v2426
    %v2462 = vadd.f32 %v239, %v2440
    %v2463 = vadd.f32 %v240, %v2454
    %2464 = vst [vmem:[#allocation9] sm:$0xff] %v2456
    %2465 = vst [vmem:[#allocation9 + $0x8] sm:$0xff] %v2457
    %2466 = vst [vmem:[#allocation9 + $0x10] sm:$0xff] %v2458
    %2467 = vst [vmem:[#allocation9 + $0x18] sm:$0xff] %v2459
    %2468 = vst [vmem:[#allocation9 + $0x20] sm:$0xff] %v2460
    %2469 = vst [vmem:[#allocation9 + $0x28] sm:$0xff] %v2461
    %2470 = vst [vmem:[#allocation9 + $0x30] sm:$0xff] %v2462
    %2471 = vst [vmem:[#allocation9 + $0x38] sm:$0xff] %v2463
    // Predicated region
    $region30: #{tpu_custom_call.1} parent=1 // pred_check
      _
    $region31: #{tpu_custom_call.1} parent=1 // pred_check_branch
      %2473 = sbr.rel (0) target = $region33
    $region32: #{tpu_custom_call.1} parent=1 // pred_region
      %2475 = vsyncadd [#allocation4], 0
      %s2477 = sshll.u32 [#allocation8], 4
      %s2478 = int_to_ptr.vmem [resolvable:$true] %s2477
      %s2479 = sshll.u32 %s4, 4
      %s2480 = int_to_ptr.hbm [resolvable:$true] %s2479
      %2482 = dma.vmem_to_hbm [thread:$0]  %s2478, 1024, %s2480, [#allocation4]
    $region33: #{tpu_custom_call.1} parent=1 // pred_fallthru
      _
    // Predicated region
    $region34: #{tpu_custom_call.1} parent=1 // pred_check
      _
    $region35: #{tpu_custom_call.1} parent=1 // pred_check_branch
      %2484 = sbr.rel (0) target = $region37
    $region36: #{tpu_custom_call.1} parent=1 // pred_region
      %2486 = vsyncadd [#allocation10], 0
      %s2487 = sshll.u32 [#allocation9], 4
      %s2488 = int_to_ptr.vmem [resolvable:$true] %s2487
      %s2489 = sshll.u32 %s5, 4
      %s2490 = int_to_ptr.hbm [resolvable:$true] %s2489
      %2495 = dma.vmem_to_hbm [thread:$0]  %s2488, 1024, %s2490, [#allocation10], 512, 512, 32
    $region37: #{tpu_custom_call.1} parent=1 // pred_fallthru
      _
    // Predicated region
    $region38: #{tpu_custom_call.1} parent=1 // pred_check
      _
    $region39: #{tpu_custom_call.1} parent=1 // pred_check_branch
      %2497 = sbr.rel (0) target = $region41
    $region40: #{tpu_custom_call.1} parent=1 // pred_region
      %2499 = vsyncadd [#allocation10], 0
      %s2501 = sshll.u32 [#allocation11], 4
      %s2502 = int_to_ptr.vmem [resolvable:$true] %s2501
      %s2503 = sshll.u32 %s6, 4
      %s2504 = int_to_ptr.hbm [resolvable:$true] %s2503
      %2506 = dma.vmem_to_hbm [thread:$0]  %s2502, 128, %s2504, [#allocation10]
    $region41: #{tpu_custom_call.1} parent=1 // pred_fallthru
      _
    // Predicated region
    $region42: #{tpu_custom_call.1} parent=1 // pred_check
      _
    $region43: #{tpu_custom_call.1} parent=1 // pred_check_branch
      %2508 = sbr.rel (0) target = $region45
    $region44: #{tpu_custom_call.1} parent=1 // pred_region
      %2510 = vsyncadd [#allocation13], 0
      %s2512 = sshll.u32 [#allocation12], 4
      %s2513 = int_to_ptr.vmem [resolvable:$true] %s2512
      %s2514 = sshll.u32 %s7, 4
      %s2515 = int_to_ptr.hbm [resolvable:$true] %s2514
      %2517 = dma.vmem_to_hbm [thread:$0]  %s2513, 512, %s2515, [#allocation13]
    $region45: #{tpu_custom_call.1} parent=1 // pred_fallthru
      _
    // Predicated region
    $region46: #{tpu_custom_call.1} parent=1 // pred_check
      _
    $region47: #{tpu_custom_call.1} parent=1 // pred_check_branch
      %2519 = sbr.rel (0) target = $region49
    $region48: #{tpu_custom_call.1} parent=1 // pred_region
      %2521 = dma.done [#allocation4], 1024
    $region49: #{tpu_custom_call.1} parent=1 // pred_fallthru
      _
    // Predicated region
    $region50: #{tpu_custom_call.1} parent=1 // pred_check
      _
    $region51: #{tpu_custom_call.1} parent=1 // pred_check_branch
      %2523 = sbr.rel (0) target = $region53
    $region52: #{tpu_custom_call.1} parent=1 // pred_region
      %2525 = dma.done [#allocation10], 1024
    $region53: #{tpu_custom_call.1} parent=1 // pred_fallthru
      _
    // Predicated region
    $region54: #{tpu_custom_call.1} parent=1 // pred_check
      _
    $region55: #{tpu_custom_call.1} parent=1 // pred_check_branch
      %2527 = sbr.rel (0) target = $region57
    $region56: #{tpu_custom_call.1} parent=1 // pred_region
      %2529 = dma.done [#allocation10], 128
    $region57: #{tpu_custom_call.1} parent=1 // pred_fallthru
      _
    // Predicated region
    $region58: #{tpu_custom_call.1} parent=1 // pred_check
      _
    $region59: #{tpu_custom_call.1} parent=1 // pred_check_branch
      %2531 = sbr.rel (0) target = $region61
    $region60: #{tpu_custom_call.1} parent=1 // pred_region
      %2533 = dma.done [#allocation13], 512
    $region61: #{tpu_custom_call.1} parent=1 // pred_fallthru
      _
    %2534 = vsyncpa [#allocation3], 1
    %2535 = vsyncpa [#allocation6], 1
    %2536 = vsyncpa [#allocation4], 1
    %2537 = vsyncpa [#allocation10], 1
    %2538 = vsyncpa [#allocation13], 1

</llo_original>
